<compile_context>
chip_gen: v5e
topology: v5e:2x2
jax: 0.10.0
libtpu: 0.0.40
codegen_flags: <defaults>
</compile_context>

<pallas_src>
from functools import partial

import jax
import jax.numpy as jnp
from jax.experimental import pallas as pl
from jax.experimental.pallas import tpu as pltpu


# ---------------------------------------------------------------------------
# Fused kernel: qkv projection, k softmax over N, head-masked context,
# wout fold, q softmax, readout, bias, LayerNorm  --  one grid step per batch
# ---------------------------------------------------------------------------
def _linear_attention_kernel(x_ref, wqkv_ref, wout_ref, mask_ref,
                             bout_ref, g_ref, o_ref,
                             *, heads, dim_head, scale, eps, n_total):
    hidden = heads * dim_head

    xb = x_ref[...].astype(jnp.bfloat16)                            # (C, N)

    # ---- single fused q/k/v projection (one MXU pass over x) -------------
    qkv = jnp.dot(wqkv_ref[...], xb,
                  preferred_element_type=jnp.float32)               # (3h, N)
    q = qkv[:hidden]                                                 # (h*d, N)
    k = qkv[hidden:2 * hidden]
    v = qkv[2 * hidden:]

    # ---- softmax over N for k, with the v/(H*W) factor folded in ---------
    k_max = jnp.max(k, axis=-1, keepdims=True)                       # (h*d, 1)
    p = jnp.exp(k - k_max)                                           # (h*d, N)
    s = jnp.sum(p, axis=-1, keepdims=True)                           # (h*d, 1)
    inv = pl.reciprocal(s * float(n_total), approx=False)            # 1/(sum*N)
    p_n = (p * inv).astype(jnp.bfloat16)                             # softmax/N

    # ---- context directly in (e, d) orientation (no transpose) -----------
    # ctx_t[e, d] = sum_n v[e, n] * p_n[d, n]
    ctx_t = jax.lax.dot_general(
        v.astype(jnp.bfloat16), p_n,
        (((1,), (1,)), ((), ())), preferred_element_type=jnp.float32)
    ctx_t = ctx_t * mask_ref[...]                 # block-diagonal head mask

    # ---- fold the 1x1 out-projection:  W_eff = wout @ ctx^T  -------------
    w_eff = jnp.dot(wout_ref[...], ctx_t,
                    preferred_element_type=jnp.float32)              # (D, h*d)

    # ---- q softmax over the per-head channel axis (per column) -----------
    n = q.shape[-1]
    q3 = q.reshape(heads, dim_head, n)
    qm = jnp.max(q3, axis=1, keepdims=True)                          # (h,1,N)
    qe = jnp.exp(q3 - qm)
    qs = jnp.sum(qe, axis=1, keepdims=True)
    q_sm = (qe * (pl.reciprocal(qs, approx=False) * scale)).reshape(hidden, n)

    # ---- effective readout + bias + LayerNorm over channels --------------
    y = jnp.dot(w_eff, q_sm, preferred_element_type=jnp.float32)     # (D, N)
    y = y + bout_ref[...]
    mean = jnp.mean(y, axis=0, keepdims=True)
    cen = y - mean
    var = jnp.mean(cen * cen, axis=0, keepdims=True)
    o_ref[...] = (cen * jax.lax.rsqrt(var + eps) * g_ref[...]).astype(o_ref.dtype)


# ---------------------------------------------------------------------------
# Wrapper
# ---------------------------------------------------------------------------
def linear_attention(x, wqkv, wout, bout, g, *, heads=4, dim_head=32):
    """x: (B, C, H, W) NCHW, like the PyTorch module.

    wqkv: (3*hidden, C)  to_qkv 1x1-conv weight (out_ch, in_ch), no bias
    wout: (C, hidden)    to_out[0] 1x1-conv weight
    bout: (C,)           to_out[0] bias
    g   : (C,)           LayerNorm gain
    """
    b, c, h, w = x.shape
    n = h * w
    hidden = heads * dim_head
    dim = c
    eps = 1e-5 if x.dtype == jnp.float32 else 1e-3
    scale = dim_head ** -0.5

    # channel-major token layout: pure reshape of NCHW, no transpose
    x_cn = x.reshape(b, c, n)

    # weights pre-cast to bf16 once (VMEM-resident across the grid)
    wqkv_bf = wqkv.astype(jnp.bfloat16)                    # (3*hidden, C)
    wout_f = wout.astype(jnp.float32)                      # (dim, hidden)
    bout2 = bout.reshape(dim, 1).astype(jnp.float32)
    g2 = g.reshape(dim, 1).astype(jnp.float32)

    # precomputed block-diagonal head mask (heads must not mix)
    ids = jnp.arange(hidden) // dim_head
    mask = (ids[:, None] == ids[None, :]).astype(jnp.float32)   # (hidden, hidden)

    out = pl.pallas_call(
        partial(_linear_attention_kernel, heads=heads, dim_head=dim_head,
                scale=scale, eps=eps, n_total=n),
        out_shape=jax.ShapeDtypeStruct((b, dim, n), x.dtype),
        grid_spec=pltpu.PrefetchScalarGridSpec(
            num_scalar_prefetch=0,
            grid=(b,),
            in_specs=[
                pl.BlockSpec((None, c, n), lambda i: (i, 0, 0)),
                pl.BlockSpec((3 * hidden, c), lambda i: (0, 0)),
                pl.BlockSpec((dim, hidden), lambda i: (0, 0)),
                pl.BlockSpec((hidden, hidden), lambda i: (0, 0)),
                pl.BlockSpec((dim, 1), lambda i: (0, 0)),
                pl.BlockSpec((dim, 1), lambda i: (0, 0)),
            ],
            out_specs=pl.BlockSpec((None, dim, n), lambda i: (i, 0, 0)),
        ),
        compiler_params=pltpu.CompilerParams(
            dimension_semantics=("parallel",),
            vmem_limit_bytes=32 * 1024 * 1024),
    )(x_cn, wqkv_bf, wout_f, mask, bout2, g2)

    return out.reshape(b, dim, h, w)


# ---------------------------------------------------------------------------
# Pure-JAX reference mirroring the PyTorch forward (all f32)
# ---------------------------------------------------------------------------
def _reference(x, wqkv, wout, bout, g, *, heads=4, dim_head=32):
    b, c, h, w = x.shape
    n = h * w
    hidden = heads * dim_head
    scale = dim_head ** -0.5
    eps = 1e-5 if x.dtype == jnp.float32 else 1e-3
    x_cn = x.reshape(b, c, n)
    qkv = jnp.einsum('oc,bcn->bon', wqkv, x_cn)          # (b, 3*hidden, n)
    q, k, v = jnp.split(qkv, 3, axis=1)

    def to_heads(t):
        return t.reshape(b, heads, dim_head, n)

    q, k, v = map(to_heads, (q, k, v))
    q = jax.nn.softmax(q, axis=-2) * scale
    k = jax.nn.softmax(k, axis=-1)
    v = v / n
    context = jnp.einsum('bhdn,bhen->bhde', k, v)
    out = jnp.einsum('bhde,bhdn->bhen', context, q)      # (b, h, e, n)
    out = out.reshape(b, hidden, n)
    y = jnp.einsum('oe,ben->bon', wout, out) + bout.reshape(1, c, 1)
    mean = jnp.mean(y, axis=1, keepdims=True)
    var = jnp.mean((y - mean) ** 2, axis=1, keepdims=True)
    y = (y - mean) * jax.lax.rsqrt(var + eps) * g.reshape(1, c, 1)
    return y.reshape(b, c, h, w)


if __name__ == "__main__":
    # module config: dim=4, heads=4, dim_head=32 -> hidden=128
    B, C, H, W = 2, 4, 16, 16
    heads, dim_head = 4, 32
    hidden = heads * dim_head

    key = jax.random.PRNGKey(0)
    kx, kqkv, kout, kb = jax.random.split(key, 4)

    x = jax.random.normal(kx, (B, C, H, W), dtype=jnp.float32)
    # to_qkv: Conv2d(dim, hidden*3, 1, bias=False) -> (3*hidden, C)
    wqkv = jax.random.normal(kqkv, (3 * hidden, C), dtype=jnp.float32) * 0.1
    # to_out[0]: Conv2d(hidden, dim, 1) -> (dim, hidden) + bias (dim,)
    wout = jax.random.normal(kout, (C, hidden), dtype=jnp.float32) * 0.1
    bout = jax.random.normal(kb, (C,), dtype=jnp.float32) * 0.1
    # LayerNorm g = ones(1, dim, 1, 1) -> (dim,)
    g = jnp.ones((C,), dtype=jnp.float32)

    y = linear_attention(x, wqkv, wout, bout, g, heads=heads, dim_head=dim_head)
    y = jax.block_until_ready(y)

    y_ref = _reference(x, wqkv, wout, bout, g, heads=heads, dim_head=dim_head)
    assert y.shape == (B, C, H, W)
    # bf16 MXU operands (f32 accumulation) -> looser tol
    assert jnp.allclose(y, y_ref, atol=2e-2, rtol=2e-2), (
        "mismatch vs reference: max abs err = "
        f"{float(jnp.max(jnp.abs(y - y_ref)))}")

    print("KERNEL_OK")
</pallas_src>

<mosaic_0001>
module attributes {stable_mosaic.version = 11 : i64} {
  func.func @_linear_attention_kernel(%arg0: i32, %arg1: memref<1x4x256xf32, #tpu.memory_space<vmem>>, %arg2: memref<384x4xbf16, #tpu.memory_space<vmem>>, %arg3: memref<4x128xf32, #tpu.memory_space<vmem>>, %arg4: memref<128x128xf32, #tpu.memory_space<vmem>>, %arg5: memref<4x1xf32, #tpu.memory_space<vmem>>, %arg6: memref<4x1xf32, #tpu.memory_space<vmem>>, %arg7: memref<1x4x256xf32, #tpu.memory_space<vmem>>) attributes {dimension_semantics = [#tpu.dimension_semantics<parallel>], iteration_bounds = array<i64: 2>, scalar_prefetch = 0 : i64, scratch_operands = 0 : i64, tpu.core_type = #tpu.core_type<tc>, window_params = [{transform_indices = @transform_0, window_bounds = array<i64: 1, 4, 256>}, {pipeline_mode = #tpu.pipeline_mode<synchronous>, transform_indices = @transform_1, window_bounds = array<i64: 384, 4>}, {pipeline_mode = #tpu.pipeline_mode<synchronous>, transform_indices = @transform_2, window_bounds = array<i64: 4, 128>}, {pipeline_mode = #tpu.pipeline_mode<synchronous>, transform_indices = @transform_3, window_bounds = array<i64: 128, 128>}, {pipeline_mode = #tpu.pipeline_mode<synchronous>, transform_indices = @transform_4, window_bounds = array<i64: 4, 1>}, {pipeline_mode = #tpu.pipeline_mode<synchronous>, transform_indices = @transform_5, window_bounds = array<i64: 4, 1>}, {transform_indices = @transform_6, window_bounds = array<i64: 1, 4, 256>}]} {
    %c0 = arith.constant 0 : index
    %c0_0 = arith.constant 0 : index
    %c0_1 = arith.constant 0 : index
    %0 = vector.load %arg1[%c0, %c0_0, %c0_1] : memref<1x4x256xf32, #tpu.memory_space<vmem>>, vector<1x4x256xf32>
    %1 = vector.shape_cast %0 : vector<1x4x256xf32> to vector<4x256xf32>
    %2 = arith.truncf %1 : vector<4x256xf32> to vector<4x256xbf16>
    %c0_2 = arith.constant 0 : index
    %c0_3 = arith.constant 0 : index
    %3 = vector.load %arg2[%c0_2, %c0_3] : memref<384x4xbf16, #tpu.memory_space<vmem>>, vector<384x4xbf16>
    %cst = arith.constant dense<0.000000e+00> : vector<384x256xf32>
    %4 = tpu.matmul %3, %2, %cst {dimension_numbers = #tpu.dot_dimension_numbers<[1], [0], [0], [1], [0, 0, 1, 1], [], []>} : vector<384x4xbf16>, vector<4x256xbf16>, vector<384x256xf32> -> vector<384x256xf32>
    %5 = vector.extract_strided_slice %4 {offsets = [0, 0], sizes = [128, 256], strides = [1, 1]} : vector<384x256xf32> to vector<128x256xf32>
    %6 = vector.extract_strided_slice %4 {offsets = [128, 0], sizes = [128, 256], strides = [1, 1]} : vector<384x256xf32> to vector<128x256xf32>
    %7 = vector.extract_strided_slice %4 {offsets = [256, 0], sizes = [128, 256], strides = [1, 1]} : vector<384x256xf32> to vector<128x256xf32>
    %cst_4 = arith.constant dense<0xFF800000> : vector<128xf32>
    %8 = vector.multi_reduction <maximumf>, %6, %cst_4 [1] : vector<128x256xf32> to vector<128xf32>
    %9 = vector.shape_cast %8 : vector<128xf32> to vector<128x1xf32>
    %10 = vector.broadcast %9 : vector<128x1xf32> to vector<128x256xf32>
    %11 = arith.subf %6, %10 : vector<128x256xf32>
    %12 = math.exp %11 : vector<128x256xf32>
    %cst_5 = arith.constant dense<0.000000e+00> : vector<128xf32>
    %13 = vector.multi_reduction <add>, %12, %cst_5 [1] : vector<128x256xf32> to vector<128xf32>
    %14 = vector.shape_cast %13 : vector<128xf32> to vector<128x1xf32>
    %cst_6 = arith.constant 2.560000e+02 : f32
    %15 = vector.broadcast %cst_6 : f32 to vector<128x1xf32>
    %16 = arith.mulf %14, %15 : vector<128x1xf32>
    %17 = tpu.reciprocal %16 : vector<128x1xf32> -> vector<128x1xf32>
    %18 = vector.broadcast %17 : vector<128x1xf32> to vector<128x256xf32>
    %19 = arith.mulf %12, %18 : vector<128x256xf32>
    %20 = arith.truncf %19 : vector<128x256xf32> to vector<128x256xbf16>
    %21 = arith.truncf %7 : vector<128x256xf32> to vector<128x256xbf16>
    %cst_7 = arith.constant dense<0.000000e+00> : vector<128x128xf32>
    %22 = tpu.matmul %21, %20, %cst_7 {dimension_numbers = #tpu.dot_dimension_numbers<[1], [1], [0], [0], [0, 0, 1, 0], [], []>} : vector<128x256xbf16>, vector<128x256xbf16>, vector<128x128xf32> -> vector<128x128xf32>
    %c0_8 = arith.constant 0 : index
    %c0_9 = arith.constant 0 : index
    %23 = vector.load %arg4[%c0_8, %c0_9] : memref<128x128xf32, #tpu.memory_space<vmem>>, vector<128x128xf32>
    %24 = arith.mulf %22, %23 : vector<128x128xf32>
    %c0_10 = arith.constant 0 : index
    %c0_11 = arith.constant 0 : index
    %25 = vector.load %arg3[%c0_10, %c0_11] : memref<4x128xf32, #tpu.memory_space<vmem>>, vector<4x128xf32>
    %cst_12 = arith.constant dense<0.000000e+00> : vector<4x128xf32>
    %26 = tpu.matmul %25, %24, %cst_12 {dimension_numbers = #tpu.dot_dimension_numbers<[1], [0], [0], [1], [0, 0, 1, 1], [], []>} : vector<4x128xf32>, vector<128x128xf32>, vector<4x128xf32> -> vector<4x128xf32>
    %27 = vector.shape_cast %5 : vector<128x256xf32> to vector<4x32x256xf32>
    %cst_13 = arith.constant dense<0xFF800000> : vector<4x256xf32>
    %28 = vector.multi_reduction <maximumf>, %27, %cst_13 [1] : vector<4x32x256xf32> to vector<4x256xf32>
    %29 = vector.shape_cast %28 : vector<4x256xf32> to vector<4x1x256xf32>
    %30 = vector.broadcast %29 : vector<4x1x256xf32> to vector<4x32x256xf32>
    %31 = arith.subf %27, %30 : vector<4x32x256xf32>
    %32 = math.exp %31 : vector<4x32x256xf32>
    %cst_14 = arith.constant dense<0.000000e+00> : vector<4x256xf32>
    %33 = vector.multi_reduction <add>, %32, %cst_14 [1] : vector<4x32x256xf32> to vector<4x256xf32>
    %34 = vector.shape_cast %33 : vector<4x256xf32> to vector<4x1x256xf32>
    %35 = tpu.reciprocal %34 : vector<4x1x256xf32> -> vector<4x1x256xf32>
    %cst_15 = arith.constant 0.176776692 : f32
    %36 = vector.broadcast %cst_15 : f32 to vector<4x1x256xf32>
    %37 = arith.mulf %35, %36 : vector<4x1x256xf32>
    %38 = vector.broadcast %37 : vector<4x1x256xf32> to vector<4x32x256xf32>
    %39 = arith.mulf %32, %38 : vector<4x32x256xf32>
    %40 = vector.shape_cast %39 : vector<4x32x256xf32> to vector<128x256xf32>
    %cst_16 = arith.constant dense<0.000000e+00> : vector<4x256xf32>
    %41 = tpu.matmul %26, %40, %cst_16 {dimension_numbers = #tpu.dot_dimension_numbers<[1], [0], [0], [1], [0, 0, 1, 1], [], []>} : vector<4x128xf32>, vector<128x256xf32>, vector<4x256xf32> -> vector<4x256xf32>
    %c0_17 = arith.constant 0 : index
    %c0_18 = arith.constant 0 : index
    %42 = vector.load %arg5[%c0_17, %c0_18] : memref<4x1xf32, #tpu.memory_space<vmem>>, vector<4x1xf32>
    %43 = vector.broadcast %42 : vector<4x1xf32> to vector<4x256xf32>
    %44 = arith.addf %41, %43 : vector<4x256xf32>
    %cst_19 = arith.constant dense<0.000000e+00> : vector<256xf32>
    %45 = vector.multi_reduction <add>, %44, %cst_19 [0] : vector<4x256xf32> to vector<256xf32>
    %46 = vector.shape_cast %45 : vector<256xf32> to vector<1x256xf32>
    %cst_20 = arith.constant 4.000000e+00 : f32
    %47 = vector.broadcast %cst_20 : f32 to vector<1x256xf32>
    %48 = arith.divf %46, %47 : vector<1x256xf32>
    %49 = vector.broadcast %48 : vector<1x256xf32> to vector<4x256xf32>
    %50 = arith.subf %44, %49 : vector<4x256xf32>
    %51 = arith.mulf %50, %50 : vector<4x256xf32>
    %cst_21 = arith.constant dense<0.000000e+00> : vector<256xf32>
    %52 = vector.multi_reduction <add>, %51, %cst_21 [0] : vector<4x256xf32> to vector<256xf32>
    %53 = vector.shape_cast %52 : vector<256xf32> to vector<1x256xf32>
    %cst_22 = arith.constant 4.000000e+00 : f32
    %54 = vector.broadcast %cst_22 : f32 to vector<1x256xf32>
    %55 = arith.divf %53, %54 : vector<1x256xf32>
    %cst_23 = arith.constant 9.99999974E-6 : f32
    %56 = vector.broadcast %cst_23 : f32 to vector<1x256xf32>
    %57 = arith.addf %55, %56 : vector<1x256xf32>
    %58 = math.rsqrt %57 : vector<1x256xf32>
    %59 = vector.broadcast %58 : vector<1x256xf32> to vector<4x256xf32>
    %60 = arith.mulf %50, %59 : vector<4x256xf32>
    %c0_24 = arith.constant 0 : index
    %c0_25 = arith.constant 0 : index
    %61 = vector.load %arg6[%c0_24, %c0_25] : memref<4x1xf32, #tpu.memory_space<vmem>>, vector<4x1xf32>
    %62 = vector.broadcast %61 : vector<4x1xf32> to vector<4x256xf32>
    %63 = arith.mulf %60, %62 : vector<4x256xf32>
    %c0_26 = arith.constant 0 : index
    %c0_27 = arith.constant 0 : index
    %c0_28 = arith.constant 0 : index
    %64 = vector.load %arg7[%c0_26, %c0_27, %c0_28] : memref<1x4x256xf32, #tpu.memory_space<vmem>>, vector<1x4x256xf32>
    %65 = vector.shape_cast %64 : vector<1x4x256xf32> to vector<4x256xf32>
    %66 = vector.shape_cast %63 : vector<4x256xf32> to vector<1x4x256xf32>
    tpu.vector_store %arg7[%c0_26, %c0_27, %c0_28], %66 {strides = array<i32>} : memref<1x4x256xf32, #tpu.memory_space<vmem>>, vector<1x4x256xf32>,
    return
  }
  func.func @transform_0(%arg0: i32) -> (i32, i32, i32) {
    %c0_i32 = arith.constant 0 : i32
    %c0_i32_0 = arith.constant 0 : i32
    %c0_i32_1 = arith.constant 0 : i32
    return %arg0, %c0_i32, %c0_i32_0 : i32, i32, i32
  }
  func.func @transform_1(%arg0: i32) -> (i32, i32) {
    %c0_i32 = arith.constant 0 : i32
    %c0_i32_0 = arith.constant 0 : i32
    %c0_i32_1 = arith.constant 0 : i32
    return %c0_i32, %c0_i32_0 : i32, i32
  }
  func.func @transform_2(%arg0: i32) -> (i32, i32) {
    %c0_i32 = arith.constant 0 : i32
    %c0_i32_0 = arith.constant 0 : i32
    %c0_i32_1 = arith.constant 0 : i32
    return %c0_i32, %c0_i32_0 : i32, i32
  }
  func.func @transform_3(%arg0: i32) -> (i32, i32) {
    %c0_i32 = arith.constant 0 : i32
    %c0_i32_0 = arith.constant 0 : i32
    %c0_i32_1 = arith.constant 0 : i32
    return %c0_i32, %c0_i32_0 : i32, i32
  }
  func.func @transform_4(%arg0: i32) -> (i32, i32) {
    %c0_i32 = arith.constant 0 : i32
    %c0_i32_0 = arith.constant 0 : i32
    %c0_i32_1 = arith.constant 0 : i32
    return %c0_i32, %c0_i32_0 : i32, i32
  }
  func.func @transform_5(%arg0: i32) -> (i32, i32) {
    %c0_i32 = arith.constant 0 : i32
    %c0_i32_0 = arith.constant 0 : i32
    %c0_i32_1 = arith.constant 0 : i32
    return %c0_i32, %c0_i32_0 : i32, i32
  }
  func.func @transform_6(%arg0: i32) -> (i32, i32, i32) {
    %c0_i32 = arith.constant 0 : i32
    %c0_i32_0 = arith.constant 0 : i32
    %c0_i32_1 = arith.constant 0 : i32
    return %arg0, %c0_i32, %c0_i32_0 : i32, i32, i32
  }
}

</mosaic_0001>

<llo_original>
// kernel: tpu_custom_call.1
$region0: #{tpu_custom_call.1}
  #allocation0 [shape = 'u32[]', space=smem, size = 0x4, offset = 0x4, fixed_abs, tag = 'smem constant byte address 0x4 - core index']
  #allocation1 [shape = 'u32[72,128]{1,0:T(1,128)}', space=vmem, size = 0x9000, scoped, tag = 'internal scratch']
  %s0 = inlined_call_operand.vmem [shape: f32[2,4,256], index: 0, kind: input, shape index: {}]
  %s1 = inlined_call_operand.vmem [shape: bf16[384,4], index: 1, kind: input, shape index: {}]
  %s2 = inlined_call_operand.vmem [shape: f32[4,128], index: 2, kind: input, shape index: {}]
  %s3 = inlined_call_operand.vmem [shape: f32[128,128], index: 3, kind: input, shape index: {}]
  %s4 = inlined_call_operand.vmem [shape: f32[4,1], index: 4, kind: input, shape index: {}]
  %s5 = inlined_call_operand.vmem [shape: f32[4,1], index: 5, kind: input, shape index: {}]
  %s6 = inlined_call_operand.hbm [shape: f32[2,4,256], index: 6, kind: output, shape index: {}]
  %s7 = sld [smem:[#allocation0]]
  $region57: #{tpu_custom_call.1} parent=0
    _
  %s9 = ssub.s32 1, %s7
  %s10 = scalar_select 0, %s9, %s7
  $region1: #{tpu_custom_call.1} parent=0
    #allocation2 [shape = 'u8[8192]{0}', space=vmem, size = 0x2000, scoped, tag = 'output window, operand 0']
    #allocation3 [shape = 's32[2]{0}', space=sflag, size = 0x8, scoped, tag = 'scoped memory for tpu_custom_call.1']
    %11 = vsyncpa [#allocation3], 0
    %s12 = scalar_lea.sflag [#allocation3], 1
    %13 = vsyncpa %s12, 0
    loop: start=0, step=1, limit=4
    $region2: #{tpu_custom_call.1} parent=1 // loop_pre_header
      _
    $region3: #{tpu_custom_call.1} parent=1 // loop_header
      %s15 = sphi 0, %s19
      %p16 = scmp.ge.s32.totalorder %s15, 4
      %s25 = sphi 0, %s27
      %s28 = sphi 0, %s25
      %s29 = sphi 0, %s28
      %s45 = sphi 0, %s29
      %s49 = sphi 0, %s49
      %s51 = sphi 0, %s49
      %s52 = sphi 0, %s51
      %s66 = sphi 0, %s52
      %s70 = sphi 0, %s70
      %s72 = sphi 0, %s70
      %s73 = sphi 0, %s72
      %s87 = sphi 0, %s73
      %s91 = sphi 0, %s91
      %s93 = sphi 0, %s91
      %s94 = sphi 0, %s93
      %s108 = sphi 0, %s94
      %s112 = sphi 0, %s112
      %s114 = sphi 0, %s112
      %s115 = sphi 0, %s114
      %s129 = sphi 0, %s115
      %s133 = sphi 0, %s133
      %s135 = sphi 0, %s133
      %s136 = sphi 0, %s135
      %s150 = sphi 0, %s136
      %s156 = sphi 0, %s158
      %s159 = sphi 0, %s156
      %s160 = sphi 0, %s159
      %s176 = sphi 0, %s160
    $region4: #{tpu_custom_call.1} parent=1 // loop_header_branch
      %18 = sbr.rel (%p16) target = $region8
    $region5: #{tpu_custom_call.1} parent=1 // loop_body
      %s20 = ssub.s32 %s15, 1
      %s21 = ssub.s32 %s15, 2
      %s22 = sadd.s32 %s15, 1
      %s23 = ssub.s32 %s15, %s22
      %p24 = scmp.eq.s32.totalorder %s23, 0
      %s26 = sadd.s32 %s25, 1
      %s27 = scalar_select %p24, %s25, %s26
      %p30 = pneg %p24
      %p31 = scmp.eq.s32.totalorder %s15, 1
      %p32 = por %p30, %p31
      %p33 = scmp.ne.s32.totalorder %s25, %s28
      %p34 = scmp.eq.s32.totalorder %s15, 0
      %p35 = por %p33, %p34
      %p36 = scmp.ne.s32.totalorder %s25, %s28
      %p37 = scmp.eq.s32.totalorder %s20, 1
      %p38 = por %p36, %p37
      %p39 = scmp.ne.s32.totalorder %s28, %s29
      %p40 = scmp.eq.s32.totalorder %s20, 0
      %p41 = por %p39, %p40
      %p42 = scmp.ne.s32.totalorder %s28, %s29
      %p43 = scmp.eq.s32.totalorder %s21, 1
      %p44 = por %p42, %p43
      %p46 = scmp.ne.s32.totalorder %s29, %s45
      %p47 = scmp.eq.s32.totalorder %s21, 0
      %p48 = por %p46, %p47
      %s50 = sadd.s32 %s49, 1
      %p53 = scmp.eq.s32.totalorder %s15, 1
      %p54 = scmp.ne.s32.totalorder %s49, %s51
      %p55 = scmp.eq.s32.totalorder %s15, 0
      %p56 = por %p54, %p55
      %p57 = scmp.ne.s32.totalorder %s49, %s51
      %p58 = scmp.eq.s32.totalorder %s20, 1
      %p59 = por %p57, %p58
      %p60 = scmp.ne.s32.totalorder %s51, %s52
      %p61 = scmp.eq.s32.totalorder %s20, 0
      %p62 = por %p60, %p61
      %p63 = scmp.ne.s32.totalorder %s51, %s52
      %p64 = scmp.eq.s32.totalorder %s21, 1
      %p65 = por %p63, %p64
      %p67 = scmp.ne.s32.totalorder %s52, %s66
      %p68 = scmp.eq.s32.totalorder %s21, 0
      %p69 = por %p67, %p68
      %s71 = sadd.s32 %s70, 1
      %p74 = scmp.eq.s32.totalorder %s15, 1
      %p75 = scmp.ne.s32.totalorder %s70, %s72
      %p76 = scmp.eq.s32.totalorder %s15, 0
      %p77 = por %p75, %p76
      %p78 = scmp.ne.s32.totalorder %s70, %s72
      %p79 = scmp.eq.s32.totalorder %s20, 1
      %p80 = por %p78, %p79
      %p81 = scmp.ne.s32.totalorder %s72, %s73
      %p82 = scmp.eq.s32.totalorder %s20, 0
      %p83 = por %p81, %p82
      %p84 = scmp.ne.s32.totalorder %s72, %s73
      %p85 = scmp.eq.s32.totalorder %s21, 1
      %p86 = por %p84, %p85
      %p88 = scmp.ne.s32.totalorder %s73, %s87
      %p89 = scmp.eq.s32.totalorder %s21, 0
      %p90 = por %p88, %p89
      %s92 = sadd.s32 %s91, 1
      %p95 = scmp.eq.s32.totalorder %s15, 1
      %p96 = scmp.ne.s32.totalorder %s91, %s93
      %p97 = scmp.eq.s32.totalorder %s15, 0
      %p98 = por %p96, %p97
      %p99 = scmp.ne.s32.totalorder %s91, %s93
      %p100 = scmp.eq.s32.totalorder %s20, 1
      %p101 = por %p99, %p100
      %p102 = scmp.ne.s32.totalorder %s93, %s94
      %p103 = scmp.eq.s32.totalorder %s20, 0
      %p104 = por %p102, %p103
      %p105 = scmp.ne.s32.totalorder %s93, %s94
      %p106 = scmp.eq.s32.totalorder %s21, 1
      %p107 = por %p105, %p106
      %p109 = scmp.ne.s32.totalorder %s94, %s108
      %p110 = scmp.eq.s32.totalorder %s21, 0
      %p111 = por %p109, %p110
      %s113 = sadd.s32 %s112, 1
      %p116 = scmp.eq.s32.totalorder %s15, 1
      %p117 = scmp.ne.s32.totalorder %s112, %s114
      %p118 = scmp.eq.s32.totalorder %s15, 0
      %p119 = por %p117, %p118
      %p120 = scmp.ne.s32.totalorder %s112, %s114
      %p121 = scmp.eq.s32.totalorder %s20, 1
      %p122 = por %p120, %p121
      %p123 = scmp.ne.s32.totalorder %s114, %s115
      %p124 = scmp.eq.s32.totalorder %s20, 0
      %p125 = por %p123, %p124
      %p126 = scmp.ne.s32.totalorder %s114, %s115
      %p127 = scmp.eq.s32.totalorder %s21, 1
      %p128 = por %p126, %p127
      %p130 = scmp.ne.s32.totalorder %s115, %s129
      %p131 = scmp.eq.s32.totalorder %s21, 0
      %p132 = por %p130, %p131
      %s134 = sadd.s32 %s133, 1
      %p137 = scmp.eq.s32.totalorder %s15, 1
      %p138 = scmp.ne.s32.totalorder %s133, %s135
      %p139 = scmp.eq.s32.totalorder %s15, 0
      %p140 = por %p138, %p139
      %p141 = scmp.ne.s32.totalorder %s133, %s135
      %p142 = scmp.eq.s32.totalorder %s20, 1
      %p143 = por %p141, %p142
      %p144 = scmp.ne.s32.totalorder %s135, %s136
      %p145 = scmp.eq.s32.totalorder %s20, 0
      %p146 = por %p144, %p145
      %p147 = scmp.ne.s32.totalorder %s135, %s136
      %p148 = scmp.eq.s32.totalorder %s21, 1
      %p149 = por %p147, %p148
      %p151 = scmp.ne.s32.totalorder %s136, %s150
      %p152 = scmp.eq.s32.totalorder %s21, 0
      %p153 = por %p151, %p152
      %s154 = ssub.s32 %s15, %s22
      %p155 = scmp.eq.s32.totalorder %s154, 0
      %s157 = sadd.s32 %s156, 1
      %s158 = scalar_select %p155, %s156, %s157
      %p161 = pneg %p155
      %p162 = scmp.eq.s32.totalorder %s15, 1
      %p163 = por %p161, %p162
      %p164 = scmp.ne.s32.totalorder %s156, %s159
      %p165 = scmp.eq.s32.totalorder %s15, 0
      %p166 = por %p164, %p165
      %p167 = scmp.ne.s32.totalorder %s156, %s159
      %p168 = scmp.eq.s32.totalorder %s20, 1
      %p169 = por %p167, %p168
      %p170 = scmp.ne.s32.totalorder %s159, %s160
      %p171 = scmp.eq.s32.totalorder %s20, 0
      %p172 = por %p170, %p171
      %p173 = scmp.ne.s32.totalorder %s159, %s160
      %p174 = scmp.eq.s32.totalorder %s21, 1
      %p175 = por %p173, %p174
      %p177 = scmp.ne.s32.totalorder %s160, %s176
      %p178 = scmp.eq.s32.totalorder %s21, 0
      %p179 = por %p177, %p178
      %p180 = scmp.le.s32.totalorder 1, %s15
      %p181 = scmp.lt.s32.totalorder %s15, 3
      %p182 = pnand %p180, %p181
      %p183 = pneg %p182
      // Predicated region
      $region9: #{tpu_custom_call.1} parent=5 // pred_check
        _
      $region10: #{tpu_custom_call.1} parent=5 // pred_check_branch
        %185 = sbr.rel (%p182) target = $region12
      $region11: #{tpu_custom_call.1} parent=5 // pred_region
        %s186 = ssub.s32 %s15, 1
        // Predicated region
        $region13: #{tpu_custom_call.1} parent=11 // pred_check
          %p187 = pneg %p62
        $region14: #{tpu_custom_call.1} parent=11 // pred_check_branch
          %189 = sbr.rel (%p187) target = $region16
        $region15: #{tpu_custom_call.1} parent=11 // pred_region
          _
        $region16: #{tpu_custom_call.1} parent=11 // pred_fallthru
          _
        // Predicated region
        $region17: #{tpu_custom_call.1} parent=11 // pred_check
          %p190 = pneg %p83
        $region18: #{tpu_custom_call.1} parent=11 // pred_check_branch
          %192 = sbr.rel (%p190) target = $region20
        $region19: #{tpu_custom_call.1} parent=11 // pred_region
          _
        $region20: #{tpu_custom_call.1} parent=11 // pred_fallthru
          _
        // Predicated region
        $region21: #{tpu_custom_call.1} parent=11 // pred_check
          %p193 = pneg %p104
        $region22: #{tpu_custom_call.1} parent=11 // pred_check_branch
          %195 = sbr.rel (%p193) target = $region24
        $region23: #{tpu_custom_call.1} parent=11 // pred_region
          _
        $region24: #{tpu_custom_call.1} parent=11 // pred_fallthru
          _
        // Predicated region
        $region25: #{tpu_custom_call.1} parent=11 // pred_check
          %p196 = pneg %p125
        $region26: #{tpu_custom_call.1} parent=11 // pred_check_branch
          %198 = sbr.rel (%p196) target = $region28
        $region27: #{tpu_custom_call.1} parent=11 // pred_region
          _
        $region28: #{tpu_custom_call.1} parent=11 // pred_fallthru
          _
        // Predicated region
        $region29: #{tpu_custom_call.1} parent=11 // pred_check
          %p199 = pneg %p146
        $region30: #{tpu_custom_call.1} parent=11 // pred_check_branch
          %201 = sbr.rel (%p199) target = $region32
        $region31: #{tpu_custom_call.1} parent=11 // pred_region
          _
        $region32: #{tpu_custom_call.1} parent=11 // pred_fallthru
          _
      $region12: #{tpu_custom_call.1} parent=5 // pred_fallthru
        _
      %p202 = scmp.lt.s32.totalorder %s15, 2
      // Predicated region
      $region33: #{tpu_custom_call.1} parent=5 // pred_check
        %p203 = pneg %p202
      $region34: #{tpu_custom_call.1} parent=5 // pred_check_branch
        %205 = sbr.rel (%p203) target = $region36
      $region35: #{tpu_custom_call.1} parent=5 // pred_region
        // Predicated region
        $region37: #{tpu_custom_call.1} parent=35 // pred_check
          %p206 = pneg %p35
        $region38: #{tpu_custom_call.1} parent=35 // pred_check_branch
          %208 = sbr.rel (%p206) target = $region40
        $region39: #{tpu_custom_call.1} parent=35 // pred_region
          %p209 = scmp.lt.s32.totalorder %s15, 1
          %s210 = scalar_select %p209, %s15, 1
          %s211 = smul.addr %s210, 2
          %s212 = smul.addr %s211, 4
          %s213 = scalar_lea.vmem %s0, %s212
        $region40: #{tpu_custom_call.1} parent=35 // pred_fallthru
          _
      $region36: #{tpu_custom_call.1} parent=5 // pred_fallthru
        _
      %p214 = scmp.le.s32.totalorder 1, %s15
      %p215 = scmp.lt.s32.totalorder %s15, 3
      %p216 = pnand %p214, %p215
      %p217 = pneg %p216
      // Predicated region
      $region41: #{tpu_custom_call.1} parent=5 // pred_check
        _
      $region42: #{tpu_custom_call.1} parent=5 // pred_check_branch
        %219 = sbr.rel (%p216) target = $region44
      $region43: #{tpu_custom_call.1} parent=5 // pred_region
        %s220 = ssub.s32 %s15, 1
        %p221 = scmp.lt.s32.totalorder %s20, 1
        %s222 = scalar_select %p221, %s20, 1
        %s223 = smul.addr %s222, 2
        %s224 = smul.addr %s223, 4
        %s225 = scalar_lea.vmem %s0, %s224
        %p226 = pneg %p41
        %p227 = pneg %p38
        %p228 = pneg %p62
        %p229 = pneg %p59
        %p230 = pneg %p83
        %p231 = pneg %p80
        %p232 = pneg %p104
        %p233 = pneg %p101
        %p234 = pneg %p125
        %p235 = pneg %p122
        %p236 = pneg %p146
        %p237 = pneg %p143
        %p238 = pneg %p172
        %p239 = pneg %p169
        %s240 = sand.u32 %s159, 1
        %s241 = scalar_lea.sflag [#allocation3], %s240
        %s242 = sand.u32 %s159, 1
        %s243 = smul.addr %s242, 8
        %s244 = scalar_lea.vmem [#allocation2], %s243
        %p245 = scmp.lt.s32.totalorder %s20, 1
        %s246 = scalar_select %p245, %s20, 1
        %s247 = smul.addr %s246, 2
        %s248 = smul.addr %s247, 4
        %s249 = scalar_lea.vmem %s0, %s248
        %v251 = vld [vmem:[%s249] sm:$0xff]
        %253 = vst [vmem:[#allocation1] ss:$2 sm:$0xff] %v251
        %v254 = vld.sshfl [vmem:[#allocation1] sm:$0xff pattern:$0x75316420]
        %v255 = vld.sshfl [vmem:[#allocation1 + $0x8] sm:$0xff pattern:$0x75316420]
        %v258 = vpack.c.bf16 %v254, %v254
        %v259 = vpack.c.bf16 %v255, %v255
        %v260 = vld [vmem:[%s1] sm:$0xf]
        %v261 = vld [vmem:[%s1 + $0x4] sm:$0xf]
        %v262 = vld [vmem:[%s1 + $0x8] sm:$0xf]
        %v263 = vld [vmem:[%s1 + $0xc] sm:$0xf]
        %v264 = vld [vmem:[%s1 + $0x10] sm:$0xf]
        %v265 = vld [vmem:[%s1 + $0x14] sm:$0xf]
        %v266 = vld [vmem:[%s1 + $0x18] sm:$0xf]
        %v267 = vld [vmem:[%s1 + $0x1c] sm:$0xf]
        %v268 = vld [vmem:[%s1 + $0x20] sm:$0xf]
        %v269 = vld [vmem:[%s1 + $0x24] sm:$0xf]
        %v270 = vld [vmem:[%s1 + $0x28] sm:$0xf]
        %v271 = vld [vmem:[%s1 + $0x2c] sm:$0xf]
        %v272 = vld [vmem:[%s1 + $0x30] sm:$0xf]
        %v273 = vld [vmem:[%s1 + $0x34] sm:$0xf]
        %v274 = vld [vmem:[%s1 + $0x38] sm:$0xf]
        %v275 = vld [vmem:[%s1 + $0x3c] sm:$0xf]
        %v276 = vld [vmem:[%s1 + $0x40] sm:$0xf]
        %v277 = vld [vmem:[%s1 + $0x44] sm:$0xf]
        %v278 = vld [vmem:[%s1 + $0x48] sm:$0xf]
        %v279 = vld [vmem:[%s1 + $0x4c] sm:$0xf]
        %v280 = vld [vmem:[%s1 + $0x50] sm:$0xf]
        %v281 = vld [vmem:[%s1 + $0x54] sm:$0xf]
        %v282 = vld [vmem:[%s1 + $0x58] sm:$0xf]
        %v283 = vld [vmem:[%s1 + $0x5c] sm:$0xf]
        %v284 = vld [vmem:[%s1 + $0x60] sm:$0xf]
        %v285 = vld [vmem:[%s1 + $0x64] sm:$0xf]
        %v286 = vld [vmem:[%s1 + $0x68] sm:$0xf]
        %v287 = vld [vmem:[%s1 + $0x6c] sm:$0xf]
        %v288 = vld [vmem:[%s1 + $0x70] sm:$0xf]
        %v289 = vld [vmem:[%s1 + $0x74] sm:$0xf]
        %v290 = vld [vmem:[%s1 + $0x78] sm:$0xf]
        %v291 = vld [vmem:[%s1 + $0x7c] sm:$0xf]
        %v292 = vld [vmem:[%s1 + $0x80] sm:$0xf]
        %v293 = vld [vmem:[%s1 + $0x84] sm:$0xf]
        %v294 = vld [vmem:[%s1 + $0x88] sm:$0xf]
        %v295 = vld [vmem:[%s1 + $0x8c] sm:$0xf]
        %v296 = vld [vmem:[%s1 + $0x90] sm:$0xf]
        %v297 = vld [vmem:[%s1 + $0x94] sm:$0xf]
        %v298 = vld [vmem:[%s1 + $0x98] sm:$0xf]
        %v299 = vld [vmem:[%s1 + $0x9c] sm:$0xf]
        %v300 = vld [vmem:[%s1 + $0xa0] sm:$0xf]
        %v301 = vld [vmem:[%s1 + $0xa4] sm:$0xf]
        %v302 = vld [vmem:[%s1 + $0xa8] sm:$0xf]
        %v303 = vld [vmem:[%s1 + $0xac] sm:$0xf]
        %v304 = vld [vmem:[%s1 + $0xb0] sm:$0xf]
        %v305 = vld [vmem:[%s1 + $0xb4] sm:$0xf]
        %v306 = vld [vmem:[%s1 + $0xb8] sm:$0xf]
        %v307 = vld [vmem:[%s1 + $0xbc] sm:$0xf]
        %v356 = vunpack.c.l.b16 %v260
        %v357 = vunpack.c.l.b16 %v261
        %v358 = vunpack.c.l.b16 %v262
        %v359 = vunpack.c.l.b16 %v263
        %v360 = vunpack.c.l.b16 %v264
        %v361 = vunpack.c.l.b16 %v265
        %v362 = vunpack.c.l.b16 %v266
        %v363 = vunpack.c.l.b16 %v267
        %v364 = vunpack.c.l.b16 %v268
        %v365 = vunpack.c.l.b16 %v269
        %v366 = vunpack.c.l.b16 %v270
        %v367 = vunpack.c.l.b16 %v271
        %v368 = vunpack.c.l.b16 %v272
        %v369 = vunpack.c.l.b16 %v273
        %v370 = vunpack.c.l.b16 %v274
        %v371 = vunpack.c.l.b16 %v275
        %v372 = vunpack.c.l.b16 %v276
        %v373 = vunpack.c.l.b16 %v277
        %v374 = vunpack.c.l.b16 %v278
        %v375 = vunpack.c.l.b16 %v279
        %v376 = vunpack.c.l.b16 %v280
        %v377 = vunpack.c.l.b16 %v281
        %v378 = vunpack.c.l.b16 %v282
        %v379 = vunpack.c.l.b16 %v283
        %v380 = vunpack.c.l.b16 %v284
        %v381 = vunpack.c.l.b16 %v285
        %v382 = vunpack.c.l.b16 %v286
        %v383 = vunpack.c.l.b16 %v287
        %v384 = vunpack.c.l.b16 %v288
        %v385 = vunpack.c.l.b16 %v289
        %v386 = vunpack.c.l.b16 %v290
        %v387 = vunpack.c.l.b16 %v291
        %v388 = vunpack.c.l.b16 %v292
        %v389 = vunpack.c.l.b16 %v293
        %v390 = vunpack.c.l.b16 %v294
        %v391 = vunpack.c.l.b16 %v295
        %v392 = vunpack.c.l.b16 %v296
        %v393 = vunpack.c.l.b16 %v297
        %v394 = vunpack.c.l.b16 %v298
        %v395 = vunpack.c.l.b16 %v299
        %v396 = vunpack.c.l.b16 %v300
        %v397 = vunpack.c.l.b16 %v301
        %v398 = vunpack.c.l.b16 %v302
        %v399 = vunpack.c.l.b16 %v303
        %v400 = vunpack.c.l.b16 %v304
        %v401 = vunpack.c.l.b16 %v305
        %v402 = vunpack.c.l.b16 %v306
        %v403 = vunpack.c.l.b16 %v307
        %v404 = vpack.c.b16 %v357, %v356
        %v405 = vpack.c.b16 %v359, %v358
        %v406 = vpack.c.b16 %v361, %v360
        %v407 = vpack.c.b16 %v363, %v362
        %v408 = vpack.c.b16 %v365, %v364
        %v409 = vpack.c.b16 %v367, %v366
        %v410 = vpack.c.b16 %v369, %v368
        %v411 = vpack.c.b16 %v371, %v370
        %v412 = vpack.c.b16 %v373, %v372
        %v413 = vpack.c.b16 %v375, %v374
        %v414 = vpack.c.b16 %v377, %v376
        %v415 = vpack.c.b16 %v379, %v378
        %v416 = vpack.c.b16 %v381, %v380
        %v417 = vpack.c.b16 %v383, %v382
        %v418 = vpack.c.b16 %v385, %v384
        %v419 = vpack.c.b16 %v387, %v386
        %v420 = vpack.c.b16 %v389, %v388
        %v421 = vpack.c.b16 %v391, %v390
        %v422 = vpack.c.b16 %v393, %v392
        %v423 = vpack.c.b16 %v395, %v394
        %v424 = vpack.c.b16 %v397, %v396
        %v425 = vpack.c.b16 %v399, %v398
        %v426 = vpack.c.b16 %v401, %v400
        %v427 = vpack.c.b16 %v403, %v402
        %vm428 = vcmask 31744
        %v430 = vsel %vm428, %v404, 0
        %v433 = vsel %vm428, %v405, 0
        %v436 = vsel %vm428, %v406, 0
        %v439 = vsel %vm428, %v407, 0
        %v442 = vsel %vm428, %v408, 0
        %v445 = vsel %vm428, %v409, 0
        %v448 = vsel %vm428, %v410, 0
        %v451 = vsel %vm428, %v411, 0
        %v454 = vsel %vm428, %v412, 0
        %v457 = vsel %vm428, %v413, 0
        %v460 = vsel %vm428, %v414, 0
        %v463 = vsel %vm428, %v415, 0
        %v466 = vsel %vm428, %v416, 0
        %v469 = vsel %vm428, %v417, 0
        %v472 = vsel %vm428, %v418, 0
        %v475 = vsel %vm428, %v419, 0
        %v478 = vsel %vm428, %v420, 0
        %v481 = vsel %vm428, %v421, 0
        %v484 = vsel %vm428, %v422, 0
        %v487 = vsel %vm428, %v423, 0
        %v490 = vsel %vm428, %v424, 0
        %v493 = vsel %vm428, %v425, 0
        %v496 = vsel %vm428, %v426, 0
        %v499 = vsel %vm428, %v427, 0
        %vm501 = vcmask 1041408
        %v503 = vsel %vm501, %v258, 0
        %v506 = vsel %vm501, %v259, 0
        %508 = vmatpush.bf16.msra.mxu0 0
        %509 = vmatpush.bf16.msra.mxu0 0
        %510 = vmatpush.bf16.msra.mxu0 0
        %511 = vmatpush.bf16.msra.mxu0 0
        %512 = vmatpush.bf16.msra.mxu0 0
        %513 = vmatpush.bf16.msra.mxu0 0
        %514 = vmatpush.bf16.msra.mxu0 0
        %515 = vmatpush.bf16.msra.mxu0 %v503
        %516 = vmatmul.bf16.gmra.mxu0 %v430
        %v517 = vpop.f32.mrf.mxu0
        %v518 = vadd.f32 0.0, %v517
        %v519 = vpop.f32.mrf.mxu0
        %v520 = vadd.f32 0.0, %v519
        %521 = vmatmul.bf16.gmra.mxu0 %v433
        %v522 = vpop.f32.mrf.mxu0
        %v523 = vadd.f32 0.0, %v522
        %v524 = vpop.f32.mrf.mxu0
        %v525 = vadd.f32 0.0, %v524
        %526 = vmatmul.bf16.gmra.mxu0 %v436
        %v527 = vpop.f32.mrf.mxu0
        %v528 = vadd.f32 0.0, %v527
        %v529 = vpop.f32.mrf.mxu0
        %v530 = vadd.f32 0.0, %v529
        %531 = vmatmul.bf16.gmra.mxu0 %v439
        %v532 = vpop.f32.mrf.mxu0
        %v533 = vadd.f32 0.0, %v532
        %v534 = vpop.f32.mrf.mxu0
        %v535 = vadd.f32 0.0, %v534
        %536 = vmatmul.bf16.gmra.mxu0 %v442
        %v537 = vpop.f32.mrf.mxu0
        %v538 = vadd.f32 0.0, %v537
        %v539 = vpop.f32.mrf.mxu0
        %v540 = vadd.f32 0.0, %v539
        %541 = vmatmul.bf16.gmra.mxu0 %v445
        %v542 = vpop.f32.mrf.mxu0
        %v543 = vadd.f32 0.0, %v542
        %v544 = vpop.f32.mrf.mxu0
        %v545 = vadd.f32 0.0, %v544
        %546 = vmatmul.bf16.gmra.mxu0 %v448
        %v547 = vpop.f32.mrf.mxu0
        %v548 = vadd.f32 0.0, %v547
        %v549 = vpop.f32.mrf.mxu0
        %v550 = vadd.f32 0.0, %v549
        %551 = vmatmul.bf16.gmra.mxu0 %v451
        %v552 = vpop.f32.mrf.mxu0
        %v553 = vadd.f32 0.0, %v552
        %v554 = vpop.f32.mrf.mxu0
        %v555 = vadd.f32 0.0, %v554
        %556 = vmatmul.bf16.gmra.mxu0 %v454
        %v557 = vpop.f32.mrf.mxu0
        %v558 = vadd.f32 0.0, %v557
        %v559 = vpop.f32.mrf.mxu0
        %v560 = vadd.f32 0.0, %v559
        %561 = vmatmul.bf16.gmra.mxu0 %v457
        %v562 = vpop.f32.mrf.mxu0
        %v563 = vadd.f32 0.0, %v562
        %v564 = vpop.f32.mrf.mxu0
        %v565 = vadd.f32 0.0, %v564
        %566 = vmatmul.bf16.gmra.mxu0 %v460
        %v567 = vpop.f32.mrf.mxu0
        %v568 = vadd.f32 0.0, %v567
        %v569 = vpop.f32.mrf.mxu0
        %v570 = vadd.f32 0.0, %v569
        %571 = vmatmul.bf16.gmra.mxu0 %v463
        %v572 = vpop.f32.mrf.mxu0
        %v573 = vadd.f32 0.0, %v572
        %v574 = vpop.f32.mrf.mxu0
        %v575 = vadd.f32 0.0, %v574
        %576 = vmatmul.bf16.gmra.mxu0 %v466
        %v577 = vpop.f32.mrf.mxu0
        %v578 = vadd.f32 0.0, %v577
        %v579 = vpop.f32.mrf.mxu0
        %v580 = vadd.f32 0.0, %v579
        %581 = vmatmul.bf16.gmra.mxu0 %v469
        %v582 = vpop.f32.mrf.mxu0
        %v583 = vadd.f32 0.0, %v582
        %v584 = vpop.f32.mrf.mxu0
        %v585 = vadd.f32 0.0, %v584
        %586 = vmatmul.bf16.gmra.mxu0 %v472
        %v587 = vpop.f32.mrf.mxu0
        %v588 = vadd.f32 0.0, %v587
        %v589 = vpop.f32.mrf.mxu0
        %v590 = vadd.f32 0.0, %v589
        %591 = vmatmul.bf16.gmra.mxu0 %v475
        %v592 = vpop.f32.mrf.mxu0
        %v593 = vadd.f32 0.0, %v592
        %v594 = vpop.f32.mrf.mxu0
        %v595 = vadd.f32 0.0, %v594
        %596 = vmatmul.bf16.gmra.mxu0 %v478
        %v597 = vpop.f32.mrf.mxu0
        %v598 = vadd.f32 0.0, %v597
        %v599 = vpop.f32.mrf.mxu0
        %v600 = vadd.f32 0.0, %v599
        %601 = vmatmul.bf16.gmra.mxu0 %v481
        %v602 = vpop.f32.mrf.mxu0
        %v603 = vadd.f32 0.0, %v602
        %v604 = vpop.f32.mrf.mxu0
        %v605 = vadd.f32 0.0, %v604
        %606 = vmatmul.bf16.gmra.mxu0 %v484
        %v607 = vpop.f32.mrf.mxu0
        %v608 = vadd.f32 0.0, %v607
        %v609 = vpop.f32.mrf.mxu0
        %v610 = vadd.f32 0.0, %v609
        %611 = vmatmul.bf16.gmra.mxu0 %v487
        %v612 = vpop.f32.mrf.mxu0
        %v613 = vadd.f32 0.0, %v612
        %v614 = vpop.f32.mrf.mxu0
        %v615 = vadd.f32 0.0, %v614
        %616 = vmatmul.bf16.gmra.mxu0 %v490
        %v617 = vpop.f32.mrf.mxu0
        %v618 = vadd.f32 0.0, %v617
        %v619 = vpop.f32.mrf.mxu0
        %v620 = vadd.f32 0.0, %v619
        %621 = vmatmul.bf16.gmra.mxu0 %v493
        %v622 = vpop.f32.mrf.mxu0
        %v623 = vadd.f32 0.0, %v622
        %v624 = vpop.f32.mrf.mxu0
        %v625 = vadd.f32 0.0, %v624
        %626 = vmatmul.bf16.gmra.mxu0 %v496
        %v627 = vpop.f32.mrf.mxu0
        %v628 = vadd.f32 0.0, %v627
        %v629 = vpop.f32.mrf.mxu0
        %v630 = vadd.f32 0.0, %v629
        %631 = vmatmul.bf16.gmra.mxu0 %v499
        %v632 = vpop.f32.mrf.mxu0
        %v633 = vadd.f32 0.0, %v632
        %v634 = vpop.f32.mrf.mxu0
        %v635 = vadd.f32 0.0, %v634
        %636 = vdwg.mxu0
        %637 = vmatpush.bf16.msra.mxu0 0
        %638 = vmatpush.bf16.msra.mxu0 0
        %639 = vmatpush.bf16.msra.mxu0 0
        %640 = vmatpush.bf16.msra.mxu0 0
        %641 = vmatpush.bf16.msra.mxu0 0
        %642 = vmatpush.bf16.msra.mxu0 0
        %643 = vmatpush.bf16.msra.mxu0 0
        %644 = vmatpush.bf16.msra.mxu0 %v506
        %645 = vmatmul.bf16.gmra.mxu0 %v430
        %v646 = vpop.f32.mrf.mxu0
        %v647 = vadd.f32 0.0, %v646
        %v648 = vpop.f32.mrf.mxu0
        %v649 = vadd.f32 0.0, %v648
        %650 = vmatmul.bf16.gmra.mxu0 %v433
        %v651 = vpop.f32.mrf.mxu0
        %v652 = vadd.f32 0.0, %v651
        %v653 = vpop.f32.mrf.mxu0
        %v654 = vadd.f32 0.0, %v653
        %655 = vmatmul.bf16.gmra.mxu0 %v436
        %v656 = vpop.f32.mrf.mxu0
        %v657 = vadd.f32 0.0, %v656
        %v658 = vpop.f32.mrf.mxu0
        %v659 = vadd.f32 0.0, %v658
        %660 = vmatmul.bf16.gmra.mxu0 %v439
        %v661 = vpop.f32.mrf.mxu0
        %v662 = vadd.f32 0.0, %v661
        %v663 = vpop.f32.mrf.mxu0
        %v664 = vadd.f32 0.0, %v663
        %665 = vmatmul.bf16.gmra.mxu0 %v442
        %v666 = vpop.f32.mrf.mxu0
        %v667 = vadd.f32 0.0, %v666
        %v668 = vpop.f32.mrf.mxu0
        %v669 = vadd.f32 0.0, %v668
        %670 = vmatmul.bf16.gmra.mxu0 %v445
        %v671 = vpop.f32.mrf.mxu0
        %v672 = vadd.f32 0.0, %v671
        %v673 = vpop.f32.mrf.mxu0
        %v674 = vadd.f32 0.0, %v673
        %675 = vmatmul.bf16.gmra.mxu0 %v448
        %v676 = vpop.f32.mrf.mxu0
        %v677 = vadd.f32 0.0, %v676
        %v678 = vpop.f32.mrf.mxu0
        %v679 = vadd.f32 0.0, %v678
        %680 = vmatmul.bf16.gmra.mxu0 %v451
        %v681 = vpop.f32.mrf.mxu0
        %v682 = vadd.f32 0.0, %v681
        %v683 = vpop.f32.mrf.mxu0
        %v684 = vadd.f32 0.0, %v683
        %685 = vmatmul.bf16.gmra.mxu0 %v454
        %v686 = vpop.f32.mrf.mxu0
        %v687 = vadd.f32 0.0, %v686
        %v688 = vpop.f32.mrf.mxu0
        %v689 = vadd.f32 0.0, %v688
        %690 = vmatmul.bf16.gmra.mxu0 %v457
        %v691 = vpop.f32.mrf.mxu0
        %v692 = vadd.f32 0.0, %v691
        %v693 = vpop.f32.mrf.mxu0
        %v694 = vadd.f32 0.0, %v693
        %695 = vmatmul.bf16.gmra.mxu0 %v460
        %v696 = vpop.f32.mrf.mxu0
        %v697 = vadd.f32 0.0, %v696
        %v698 = vpop.f32.mrf.mxu0
        %v699 = vadd.f32 0.0, %v698
        %700 = vmatmul.bf16.gmra.mxu0 %v463
        %v701 = vpop.f32.mrf.mxu0
        %v702 = vadd.f32 0.0, %v701
        %v703 = vpop.f32.mrf.mxu0
        %v704 = vadd.f32 0.0, %v703
        %705 = vmatmul.bf16.gmra.mxu0 %v466
        %v706 = vpop.f32.mrf.mxu0
        %v707 = vadd.f32 0.0, %v706
        %v708 = vpop.f32.mrf.mxu0
        %v709 = vadd.f32 0.0, %v708
        %710 = vmatmul.bf16.gmra.mxu0 %v469
        %v711 = vpop.f32.mrf.mxu0
        %v712 = vadd.f32 0.0, %v711
        %v713 = vpop.f32.mrf.mxu0
        %v714 = vadd.f32 0.0, %v713
        %715 = vmatmul.bf16.gmra.mxu0 %v472
        %v716 = vpop.f32.mrf.mxu0
        %v717 = vadd.f32 0.0, %v716
        %v718 = vpop.f32.mrf.mxu0
        %v719 = vadd.f32 0.0, %v718
        %720 = vmatmul.bf16.gmra.mxu0 %v475
        %v721 = vpop.f32.mrf.mxu0
        %v722 = vadd.f32 0.0, %v721
        %v723 = vpop.f32.mrf.mxu0
        %v724 = vadd.f32 0.0, %v723
        %725 = vmatmul.bf16.gmra.mxu0 %v478
        %v726 = vpop.f32.mrf.mxu0
        %v727 = vadd.f32 0.0, %v726
        %v728 = vpop.f32.mrf.mxu0
        %v729 = vadd.f32 0.0, %v728
        %730 = vmatmul.bf16.gmra.mxu0 %v481
        %v731 = vpop.f32.mrf.mxu0
        %v732 = vadd.f32 0.0, %v731
        %v733 = vpop.f32.mrf.mxu0
        %v734 = vadd.f32 0.0, %v733
        %735 = vmatmul.bf16.gmra.mxu0 %v484
        %v736 = vpop.f32.mrf.mxu0
        %v737 = vadd.f32 0.0, %v736
        %v738 = vpop.f32.mrf.mxu0
        %v739 = vadd.f32 0.0, %v738
        %740 = vmatmul.bf16.gmra.mxu0 %v487
        %v741 = vpop.f32.mrf.mxu0
        %v742 = vadd.f32 0.0, %v741
        %v743 = vpop.f32.mrf.mxu0
        %v744 = vadd.f32 0.0, %v743
        %745 = vmatmul.bf16.gmra.mxu0 %v490
        %v746 = vpop.f32.mrf.mxu0
        %v747 = vadd.f32 0.0, %v746
        %v748 = vpop.f32.mrf.mxu0
        %v749 = vadd.f32 0.0, %v748
        %750 = vmatmul.bf16.gmra.mxu0 %v493
        %v751 = vpop.f32.mrf.mxu0
        %v752 = vadd.f32 0.0, %v751
        %v753 = vpop.f32.mrf.mxu0
        %v754 = vadd.f32 0.0, %v753
        %755 = vmatmul.bf16.gmra.mxu0 %v496
        %v756 = vpop.f32.mrf.mxu0
        %v757 = vadd.f32 0.0, %v756
        %v758 = vpop.f32.mrf.mxu0
        %v759 = vadd.f32 0.0, %v758
        %760 = vmatmul.bf16.gmra.mxu0 %v499
        %v761 = vpop.f32.mrf.mxu0
        %v762 = vadd.f32 0.0, %v761
        %v763 = vpop.f32.mrf.mxu0
        %v764 = vadd.f32 0.0, %v763
        %765 = vdwg.mxu0
        %v766 = vmax.f32 %v558, %v687
        %767 = vmax.xlane.f32.xlu0 %v766
        %v768 = vpop.xlane.xlu0 %767
        %v769 = vmax.f32 %v560, %v689
        %770 = vmax.xlane.f32.xlu0 %v769
        %v771 = vpop.xlane.xlu0 %770
        %v772 = vmax.f32 %v563, %v692
        %773 = vmax.xlane.f32.xlu0 %v772
        %v774 = vpop.xlane.xlu0 %773
        %v775 = vmax.f32 %v565, %v694
        %776 = vmax.xlane.f32.xlu0 %v775
        %v777 = vpop.xlane.xlu0 %776
        %v778 = vmax.f32 %v568, %v697
        %779 = vmax.xlane.f32.xlu0 %v778
        %v780 = vpop.xlane.xlu0 %779
        %v781 = vmax.f32 %v570, %v699
        %782 = vmax.xlane.f32.xlu0 %v781
        %v783 = vpop.xlane.xlu0 %782
        %v784 = vmax.f32 %v573, %v702
        %785 = vmax.xlane.f32.xlu0 %v784
        %v786 = vpop.xlane.xlu0 %785
        %v787 = vmax.f32 %v575, %v704
        %788 = vmax.xlane.f32.xlu0 %v787
        %v789 = vpop.xlane.xlu0 %788
        %v790 = vmax.f32 %v578, %v707
        %791 = vmax.xlane.f32.xlu0 %v790
        %v792 = vpop.xlane.xlu0 %791
        %v793 = vmax.f32 %v580, %v709
        %794 = vmax.xlane.f32.xlu0 %v793
        %v795 = vpop.xlane.xlu0 %794
        %v796 = vmax.f32 %v583, %v712
        %797 = vmax.xlane.f32.xlu0 %v796
        %v798 = vpop.xlane.xlu0 %797
        %v799 = vmax.f32 %v585, %v714
        %800 = vmax.xlane.f32.xlu0 %v799
        %v801 = vpop.xlane.xlu0 %800
        %v802 = vmax.f32 %v588, %v717
        %803 = vmax.xlane.f32.xlu0 %v802
        %v804 = vpop.xlane.xlu0 %803
        %v805 = vmax.f32 %v590, %v719
        %806 = vmax.xlane.f32.xlu0 %v805
        %v807 = vpop.xlane.xlu0 %806
        %v808 = vmax.f32 %v593, %v722
        %809 = vmax.xlane.f32.xlu0 %v808
        %v810 = vpop.xlane.xlu0 %809
        %v811 = vmax.f32 %v595, %v724
        %812 = vmax.xlane.f32.xlu0 %v811
        %v813 = vpop.xlane.xlu0 %812
        %v814 = vsub.f32 %v558, %v768
        %v815 = vsub.f32 %v687, %v768
        %v816 = vsub.f32 %v560, %v771
        %v817 = vsub.f32 %v689, %v771
        %v818 = vsub.f32 %v563, %v774
        %v819 = vsub.f32 %v692, %v774
        %v820 = vsub.f32 %v565, %v777
        %v821 = vsub.f32 %v694, %v777
        %v822 = vsub.f32 %v568, %v780
        %v823 = vsub.f32 %v697, %v780
        %v824 = vsub.f32 %v570, %v783
        %v825 = vsub.f32 %v699, %v783
        %v826 = vsub.f32 %v573, %v786
        %v827 = vsub.f32 %v702, %v786
        %v828 = vsub.f32 %v575, %v789
        %v829 = vsub.f32 %v704, %v789
        %v830 = vsub.f32 %v578, %v792
        %v831 = vsub.f32 %v707, %v792
        %v832 = vsub.f32 %v580, %v795
        %v833 = vsub.f32 %v709, %v795
        %v834 = vsub.f32 %v583, %v798
        %v835 = vsub.f32 %v712, %v798
        %v836 = vsub.f32 %v585, %v801
        %v837 = vsub.f32 %v714, %v801
        %v838 = vsub.f32 %v588, %v804
        %v839 = vsub.f32 %v717, %v804
        %v840 = vsub.f32 %v590, %v807
        %v841 = vsub.f32 %v719, %v807
        %v842 = vsub.f32 %v593, %v810
        %v843 = vsub.f32 %v722, %v810
        %v844 = vsub.f32 %v595, %v813
        %v845 = vsub.f32 %v724, %v813
        %v846 = vmul.f32 %v814, 1.442695
        %v847 = vpow.pop %v846
        %v848 = vmul.f32 %v815, 1.442695
        %v849 = vpow.pop %v848
        %v850 = vmul.f32 %v816, 1.442695
        %v851 = vpow.pop %v850
        %v852 = vmul.f32 %v817, 1.442695
        %v853 = vpow.pop %v852
        %v854 = vmul.f32 %v818, 1.442695
        %v855 = vpow.pop %v854
        %v856 = vmul.f32 %v819, 1.442695
        %v857 = vpow.pop %v856
        %v858 = vmul.f32 %v820, 1.442695
        %v859 = vpow.pop %v858
        %v860 = vmul.f32 %v821, 1.442695
        %v861 = vpow.pop %v860
        %v862 = vmul.f32 %v822, 1.442695
        %v863 = vpow.pop %v862
        %v864 = vmul.f32 %v823, 1.442695
        %v865 = vpow.pop %v864
        %v866 = vmul.f32 %v824, 1.442695
        %v867 = vpow.pop %v866
        %v868 = vmul.f32 %v825, 1.442695
        %v869 = vpow.pop %v868
        %v870 = vmul.f32 %v826, 1.442695
        %v871 = vpow.pop %v870
        %v872 = vmul.f32 %v827, 1.442695
        %v873 = vpow.pop %v872
        %v874 = vmul.f32 %v828, 1.442695
        %v875 = vpow.pop %v874
        %v876 = vmul.f32 %v829, 1.442695
        %v877 = vpow.pop %v876
        %v878 = vmul.f32 %v830, 1.442695
        %v879 = vpow.pop %v878
        %v880 = vmul.f32 %v831, 1.442695
        %v881 = vpow.pop %v880
        %v882 = vmul.f32 %v832, 1.442695
        %v883 = vpow.pop %v882
        %v884 = vmul.f32 %v833, 1.442695
        %v885 = vpow.pop %v884
        %v886 = vmul.f32 %v834, 1.442695
        %v887 = vpow.pop %v886
        %v888 = vmul.f32 %v835, 1.442695
        %v889 = vpow.pop %v888
        %v890 = vmul.f32 %v836, 1.442695
        %v891 = vpow.pop %v890
        %v892 = vmul.f32 %v837, 1.442695
        %v893 = vpow.pop %v892
        %v894 = vmul.f32 %v838, 1.442695
        %v895 = vpow.pop %v894
        %v896 = vmul.f32 %v839, 1.442695
        %v897 = vpow.pop %v896
        %v898 = vmul.f32 %v840, 1.442695
        %v899 = vpow.pop %v898
        %v900 = vmul.f32 %v841, 1.442695
        %v901 = vpow.pop %v900
        %v902 = vmul.f32 %v842, 1.442695
        %v903 = vpow.pop %v902
        %v904 = vmul.f32 %v843, 1.442695
        %v905 = vpow.pop %v904
        %v906 = vmul.f32 %v844, 1.442695
        %v907 = vpow.pop %v906
        %v908 = vmul.f32 %v845, 1.442695
        %v909 = vpow.pop %v908
        %v910 = vadd.f32 %v847, %v849
        %911 = vadd.xlane.f32.xlu0 %v910
        %v912 = vpop.xlane.xlu0 %911
        %v913 = vadd.f32 %v851, %v853
        %914 = vadd.xlane.f32.xlu0 %v913
        %v915 = vpop.xlane.xlu0 %914
        %v916 = vadd.f32 %v855, %v857
        %917 = vadd.xlane.f32.xlu0 %v916
        %v918 = vpop.xlane.xlu0 %917
        %v919 = vadd.f32 %v859, %v861
        %920 = vadd.xlane.f32.xlu0 %v919
        %v921 = vpop.xlane.xlu0 %920
        %v922 = vadd.f32 %v863, %v865
        %923 = vadd.xlane.f32.xlu0 %v922
        %v924 = vpop.xlane.xlu0 %923
        %v925 = vadd.f32 %v867, %v869
        %926 = vadd.xlane.f32.xlu0 %v925
        %v927 = vpop.xlane.xlu0 %926
        %v928 = vadd.f32 %v871, %v873
        %929 = vadd.xlane.f32.xlu0 %v928
        %v930 = vpop.xlane.xlu0 %929
        %v931 = vadd.f32 %v875, %v877
        %932 = vadd.xlane.f32.xlu0 %v931
        %v933 = vpop.xlane.xlu0 %932
        %v934 = vadd.f32 %v879, %v881
        %935 = vadd.xlane.f32.xlu0 %v934
        %v936 = vpop.xlane.xlu0 %935
        %v937 = vadd.f32 %v883, %v885
        %938 = vadd.xlane.f32.xlu0 %v937
        %v939 = vpop.xlane.xlu0 %938
        %v940 = vadd.f32 %v887, %v889
        %941 = vadd.xlane.f32.xlu0 %v940
        %v942 = vpop.xlane.xlu0 %941
        %v943 = vadd.f32 %v891, %v893
        %944 = vadd.xlane.f32.xlu0 %v943
        %v945 = vpop.xlane.xlu0 %944
        %v946 = vadd.f32 %v895, %v897
        %947 = vadd.xlane.f32.xlu0 %v946
        %v948 = vpop.xlane.xlu0 %947
        %v949 = vadd.f32 %v899, %v901
        %950 = vadd.xlane.f32.xlu0 %v949
        %v951 = vpop.xlane.xlu0 %950
        %v952 = vadd.f32 %v903, %v905
        %953 = vadd.xlane.f32.xlu0 %v952
        %v954 = vpop.xlane.xlu0 %953
        %v955 = vadd.f32 %v907, %v909
        %956 = vadd.xlane.f32.xlu0 %v955
        %v957 = vpop.xlane.xlu0 %956
        %v958 = vmul.f32 %v912, 256.0
        %v959 = vmul.f32 %v915, 256.0
        %v960 = vmul.f32 %v918, 256.0
        %v961 = vmul.f32 %v921, 256.0
        %v962 = vmul.f32 %v924, 256.0
        %v963 = vmul.f32 %v927, 256.0
        %v964 = vmul.f32 %v930, 256.0
        %v965 = vmul.f32 %v933, 256.0
        %v966 = vmul.f32 %v936, 256.0
        %v967 = vmul.f32 %v939, 256.0
        %v968 = vmul.f32 %v942, 256.0
        %v969 = vmul.f32 %v945, 256.0
        %v970 = vmul.f32 %v948, 256.0
        %v971 = vmul.f32 %v951, 256.0
        %v972 = vmul.f32 %v954, 256.0
        %v973 = vmul.f32 %v957, 256.0
        %v974 = vrcp.pop %v958
        %v975 = vmul.f32 %v958, %v974
        %v976 = vsub.f32 1.0, %v975
        %v977 = vmul.f32 %v974, %v976
        %v978 = vadd.f32 %v974, %v977
        %vm979 = vweird.f32 %v958
        %vm980 = vweird.f32 %v974
        %vm981 = vmor %vm979, %vm980
        %v982 = vsel %vm981, %v974, %v978
        %v983 = vand.u32 2147483647, %v958
        %vm984 = vcmp.eq.f32.partialorder %v983, 8.507059e+37
        %v985 = vand.u32 %v958, 2147483648
        %v986 = vor.u32 1.1754944e-38, %v985
        %v987 = vsel %vm984, %v986, %v982
        %v988 = vrcp.pop %v959
        %v989 = vmul.f32 %v959, %v988
        %v990 = vsub.f32 1.0, %v989
        %v991 = vmul.f32 %v988, %v990
        %v992 = vadd.f32 %v988, %v991
        %vm993 = vweird.f32 %v959
        %vm994 = vweird.f32 %v988
        %vm995 = vmor %vm993, %vm994
        %v996 = vsel %vm995, %v988, %v992
        %v997 = vand.u32 2147483647, %v959
        %vm998 = vcmp.eq.f32.partialorder %v997, 8.507059e+37
        %v999 = vand.u32 %v959, 2147483648
        %v1000 = vor.u32 1.1754944e-38, %v999
        %v1001 = vsel %vm998, %v1000, %v996
        %v1002 = vrcp.pop %v960
        %v1003 = vmul.f32 %v960, %v1002
        %v1004 = vsub.f32 1.0, %v1003
        %v1005 = vmul.f32 %v1002, %v1004
        %v1006 = vadd.f32 %v1002, %v1005
        %vm1007 = vweird.f32 %v960
        %vm1008 = vweird.f32 %v1002
        %vm1009 = vmor %vm1007, %vm1008
        %v1010 = vsel %vm1009, %v1002, %v1006
        %v1011 = vand.u32 2147483647, %v960
        %vm1012 = vcmp.eq.f32.partialorder %v1011, 8.507059e+37
        %v1013 = vand.u32 %v960, 2147483648
        %v1014 = vor.u32 1.1754944e-38, %v1013
        %v1015 = vsel %vm1012, %v1014, %v1010
        %v1016 = vrcp.pop %v961
        %v1017 = vmul.f32 %v961, %v1016
        %v1018 = vsub.f32 1.0, %v1017
        %v1019 = vmul.f32 %v1016, %v1018
        %v1020 = vadd.f32 %v1016, %v1019
        %vm1021 = vweird.f32 %v961
        %vm1022 = vweird.f32 %v1016
        %vm1023 = vmor %vm1021, %vm1022
        %v1024 = vsel %vm1023, %v1016, %v1020
        %v1025 = vand.u32 2147483647, %v961
        %vm1026 = vcmp.eq.f32.partialorder %v1025, 8.507059e+37
        %v1027 = vand.u32 %v961, 2147483648
        %v1028 = vor.u32 1.1754944e-38, %v1027
        %v1029 = vsel %vm1026, %v1028, %v1024
        %v1030 = vrcp.pop %v962
        %v1031 = vmul.f32 %v962, %v1030
        %v1032 = vsub.f32 1.0, %v1031
        %v1033 = vmul.f32 %v1030, %v1032
        %v1034 = vadd.f32 %v1030, %v1033
        %vm1035 = vweird.f32 %v962
        %vm1036 = vweird.f32 %v1030
        %vm1037 = vmor %vm1035, %vm1036
        %v1038 = vsel %vm1037, %v1030, %v1034
        %v1039 = vand.u32 2147483647, %v962
        %vm1040 = vcmp.eq.f32.partialorder %v1039, 8.507059e+37
        %v1041 = vand.u32 %v962, 2147483648
        %v1042 = vor.u32 1.1754944e-38, %v1041
        %v1043 = vsel %vm1040, %v1042, %v1038
        %v1044 = vrcp.pop %v963
        %v1045 = vmul.f32 %v963, %v1044
        %v1046 = vsub.f32 1.0, %v1045
        %v1047 = vmul.f32 %v1044, %v1046
        %v1048 = vadd.f32 %v1044, %v1047
        %vm1049 = vweird.f32 %v963
        %vm1050 = vweird.f32 %v1044
        %vm1051 = vmor %vm1049, %vm1050
        %v1052 = vsel %vm1051, %v1044, %v1048
        %v1053 = vand.u32 2147483647, %v963
        %vm1054 = vcmp.eq.f32.partialorder %v1053, 8.507059e+37
        %v1055 = vand.u32 %v963, 2147483648
        %v1056 = vor.u32 1.1754944e-38, %v1055
        %v1057 = vsel %vm1054, %v1056, %v1052
        %v1058 = vrcp.pop %v964
        %v1059 = vmul.f32 %v964, %v1058
        %v1060 = vsub.f32 1.0, %v1059
        %v1061 = vmul.f32 %v1058, %v1060
        %v1062 = vadd.f32 %v1058, %v1061
        %vm1063 = vweird.f32 %v964
        %vm1064 = vweird.f32 %v1058
        %vm1065 = vmor %vm1063, %vm1064
        %v1066 = vsel %vm1065, %v1058, %v1062
        %v1067 = vand.u32 2147483647, %v964
        %vm1068 = vcmp.eq.f32.partialorder %v1067, 8.507059e+37
        %v1069 = vand.u32 %v964, 2147483648
        %v1070 = vor.u32 1.1754944e-38, %v1069
        %v1071 = vsel %vm1068, %v1070, %v1066
        %v1072 = vrcp.pop %v965
        %v1073 = vmul.f32 %v965, %v1072
        %v1074 = vsub.f32 1.0, %v1073
        %v1075 = vmul.f32 %v1072, %v1074
        %v1076 = vadd.f32 %v1072, %v1075
        %vm1077 = vweird.f32 %v965
        %vm1078 = vweird.f32 %v1072
        %vm1079 = vmor %vm1077, %vm1078
        %v1080 = vsel %vm1079, %v1072, %v1076
        %v1081 = vand.u32 2147483647, %v965
        %vm1082 = vcmp.eq.f32.partialorder %v1081, 8.507059e+37
        %v1083 = vand.u32 %v965, 2147483648
        %v1084 = vor.u32 1.1754944e-38, %v1083
        %v1085 = vsel %vm1082, %v1084, %v1080
        %v1086 = vrcp.pop %v966
        %v1087 = vmul.f32 %v966, %v1086
        %v1088 = vsub.f32 1.0, %v1087
        %v1089 = vmul.f32 %v1086, %v1088
        %v1090 = vadd.f32 %v1086, %v1089
        %vm1091 = vweird.f32 %v966
        %vm1092 = vweird.f32 %v1086
        %vm1093 = vmor %vm1091, %vm1092
        %v1094 = vsel %vm1093, %v1086, %v1090
        %v1095 = vand.u32 2147483647, %v966
        %vm1096 = vcmp.eq.f32.partialorder %v1095, 8.507059e+37
        %v1097 = vand.u32 %v966, 2147483648
        %v1098 = vor.u32 1.1754944e-38, %v1097
        %v1099 = vsel %vm1096, %v1098, %v1094
        %v1100 = vrcp.pop %v967
        %v1101 = vmul.f32 %v967, %v1100
        %v1102 = vsub.f32 1.0, %v1101
        %v1103 = vmul.f32 %v1100, %v1102
        %v1104 = vadd.f32 %v1100, %v1103
        %vm1105 = vweird.f32 %v967
        %vm1106 = vweird.f32 %v1100
        %vm1107 = vmor %vm1105, %vm1106
        %v1108 = vsel %vm1107, %v1100, %v1104
        %v1109 = vand.u32 2147483647, %v967
        %vm1110 = vcmp.eq.f32.partialorder %v1109, 8.507059e+37
        %v1111 = vand.u32 %v967, 2147483648
        %v1112 = vor.u32 1.1754944e-38, %v1111
        %v1113 = vsel %vm1110, %v1112, %v1108
        %v1114 = vrcp.pop %v968
        %v1115 = vmul.f32 %v968, %v1114
        %v1116 = vsub.f32 1.0, %v1115
        %v1117 = vmul.f32 %v1114, %v1116
        %v1118 = vadd.f32 %v1114, %v1117
        %vm1119 = vweird.f32 %v968
        %vm1120 = vweird.f32 %v1114
        %vm1121 = vmor %vm1119, %vm1120
        %v1122 = vsel %vm1121, %v1114, %v1118
        %v1123 = vand.u32 2147483647, %v968
        %vm1124 = vcmp.eq.f32.partialorder %v1123, 8.507059e+37
        %v1125 = vand.u32 %v968, 2147483648
        %v1126 = vor.u32 1.1754944e-38, %v1125
        %v1127 = vsel %vm1124, %v1126, %v1122
        %v1128 = vrcp.pop %v969
        %v1129 = vmul.f32 %v969, %v1128
        %v1130 = vsub.f32 1.0, %v1129
        %v1131 = vmul.f32 %v1128, %v1130
        %v1132 = vadd.f32 %v1128, %v1131
        %vm1133 = vweird.f32 %v969
        %vm1134 = vweird.f32 %v1128
        %vm1135 = vmor %vm1133, %vm1134
        %v1136 = vsel %vm1135, %v1128, %v1132
        %v1137 = vand.u32 2147483647, %v969
        %vm1138 = vcmp.eq.f32.partialorder %v1137, 8.507059e+37
        %v1139 = vand.u32 %v969, 2147483648
        %v1140 = vor.u32 1.1754944e-38, %v1139
        %v1141 = vsel %vm1138, %v1140, %v1136
        %v1142 = vrcp.pop %v970
        %v1143 = vmul.f32 %v970, %v1142
        %v1144 = vsub.f32 1.0, %v1143
        %v1145 = vmul.f32 %v1142, %v1144
        %v1146 = vadd.f32 %v1142, %v1145
        %vm1147 = vweird.f32 %v970
        %vm1148 = vweird.f32 %v1142
        %vm1149 = vmor %vm1147, %vm1148
        %v1150 = vsel %vm1149, %v1142, %v1146
        %v1151 = vand.u32 2147483647, %v970
        %vm1152 = vcmp.eq.f32.partialorder %v1151, 8.507059e+37
        %v1153 = vand.u32 %v970, 2147483648
        %v1154 = vor.u32 1.1754944e-38, %v1153
        %v1155 = vsel %vm1152, %v1154, %v1150
        %v1156 = vrcp.pop %v971
        %v1157 = vmul.f32 %v971, %v1156
        %v1158 = vsub.f32 1.0, %v1157
        %v1159 = vmul.f32 %v1156, %v1158
        %v1160 = vadd.f32 %v1156, %v1159
        %vm1161 = vweird.f32 %v971
        %vm1162 = vweird.f32 %v1156
        %vm1163 = vmor %vm1161, %vm1162
        %v1164 = vsel %vm1163, %v1156, %v1160
        %v1165 = vand.u32 2147483647, %v971
        %vm1166 = vcmp.eq.f32.partialorder %v1165, 8.507059e+37
        %v1167 = vand.u32 %v971, 2147483648
        %v1168 = vor.u32 1.1754944e-38, %v1167
        %v1169 = vsel %vm1166, %v1168, %v1164
        %v1170 = vrcp.pop %v972
        %v1171 = vmul.f32 %v972, %v1170
        %v1172 = vsub.f32 1.0, %v1171
        %v1173 = vmul.f32 %v1170, %v1172
        %v1174 = vadd.f32 %v1170, %v1173
        %vm1175 = vweird.f32 %v972
        %vm1176 = vweird.f32 %v1170
        %vm1177 = vmor %vm1175, %vm1176
        %v1178 = vsel %vm1177, %v1170, %v1174
        %v1179 = vand.u32 2147483647, %v972
        %vm1180 = vcmp.eq.f32.partialorder %v1179, 8.507059e+37
        %v1181 = vand.u32 %v972, 2147483648
        %v1182 = vor.u32 1.1754944e-38, %v1181
        %v1183 = vsel %vm1180, %v1182, %v1178
        %v1184 = vrcp.pop %v973
        %v1185 = vmul.f32 %v973, %v1184
        %v1186 = vsub.f32 1.0, %v1185
        %v1187 = vmul.f32 %v1184, %v1186
        %v1188 = vadd.f32 %v1184, %v1187
        %vm1189 = vweird.f32 %v973
        %vm1190 = vweird.f32 %v1184
        %vm1191 = vmor %vm1189, %vm1190
        %v1192 = vsel %vm1191, %v1184, %v1188
        %v1193 = vand.u32 2147483647, %v973
        %vm1194 = vcmp.eq.f32.partialorder %v1193, 8.507059e+37
        %v1195 = vand.u32 %v973, 2147483648
        %v1196 = vor.u32 1.1754944e-38, %v1195
        %v1197 = vsel %vm1194, %v1196, %v1192
        %v1198 = vmul.f32 %v847, %v987
        %v1199 = vmul.f32 %v849, %v987
        %v1200 = vmul.f32 %v851, %v1001
        %v1201 = vmul.f32 %v853, %v1001
        %v1202 = vmul.f32 %v855, %v1015
        %v1203 = vmul.f32 %v857, %v1015
        %v1204 = vmul.f32 %v859, %v1029
        %v1205 = vmul.f32 %v861, %v1029
        %v1206 = vmul.f32 %v863, %v1043
        %v1207 = vmul.f32 %v865, %v1043
        %v1208 = vmul.f32 %v867, %v1057
        %v1209 = vmul.f32 %v869, %v1057
        %v1210 = vmul.f32 %v871, %v1071
        %v1211 = vmul.f32 %v873, %v1071
        %v1212 = vmul.f32 %v875, %v1085
        %v1213 = vmul.f32 %v877, %v1085
        %v1214 = vmul.f32 %v879, %v1099
        %v1215 = vmul.f32 %v881, %v1099
        %v1216 = vmul.f32 %v883, %v1113
        %v1217 = vmul.f32 %v885, %v1113
        %v1218 = vmul.f32 %v887, %v1127
        %v1219 = vmul.f32 %v889, %v1127
        %v1220 = vmul.f32 %v891, %v1141
        %v1221 = vmul.f32 %v893, %v1141
        %v1222 = vmul.f32 %v895, %v1155
        %v1223 = vmul.f32 %v897, %v1155
        %v1224 = vmul.f32 %v899, %v1169
        %v1225 = vmul.f32 %v901, %v1169
        %v1226 = vmul.f32 %v903, %v1183
        %v1227 = vmul.f32 %v905, %v1183
        %v1228 = vmul.f32 %v907, %v1197
        %v1229 = vmul.f32 %v909, %v1197
        %v1230 = vpack.c.bf16 %v1200, %v1198
        %v1231 = vpack.c.bf16 %v1201, %v1199
        %v1232 = vpack.c.bf16 %v1204, %v1202
        %v1233 = vpack.c.bf16 %v1205, %v1203
        %v1234 = vpack.c.bf16 %v1208, %v1206
        %v1235 = vpack.c.bf16 %v1209, %v1207
        %v1236 = vpack.c.bf16 %v1212, %v1210
        %v1237 = vpack.c.bf16 %v1213, %v1211
        %v1238 = vpack.c.bf16 %v1216, %v1214
        %v1239 = vpack.c.bf16 %v1217, %v1215
        %v1240 = vpack.c.bf16 %v1220, %v1218
        %v1241 = vpack.c.bf16 %v1221, %v1219
        %v1242 = vpack.c.bf16 %v1224, %v1222
        %v1243 = vpack.c.bf16 %v1225, %v1223
        %v1244 = vpack.c.bf16 %v1228, %v1226
        %v1245 = vpack.c.bf16 %v1229, %v1227
        %v1246 = vpack.c.bf16 %v600, %v598
        %v1247 = vpack.c.bf16 %v729, %v727
        %v1248 = vpack.c.bf16 %v605, %v603
        %v1249 = vpack.c.bf16 %v734, %v732
        %v1250 = vpack.c.bf16 %v610, %v608
        %v1251 = vpack.c.bf16 %v739, %v737
        %v1252 = vpack.c.bf16 %v615, %v613
        %v1253 = vpack.c.bf16 %v744, %v742
        %v1254 = vpack.c.bf16 %v620, %v618
        %v1255 = vpack.c.bf16 %v749, %v747
        %v1256 = vpack.c.bf16 %v625, %v623
        %v1257 = vpack.c.bf16 %v754, %v752
        %v1258 = vpack.c.bf16 %v630, %v628
        %v1259 = vpack.c.bf16 %v759, %v757
        %v1260 = vpack.c.bf16 %v635, %v633
        %v1261 = vpack.c.bf16 %v764, %v762
        %1262 = vmatpush.bf16.xpose.msra.mxu0 %v1244
        %1263 = vmatpush.bf16.xpose.msra.mxu0 %v1242
        %1264 = vmatpush.bf16.xpose.msra.mxu0 %v1240
        %1265 = vmatpush.bf16.xpose.msra.mxu0 %v1238
        %1266 = vmatpush.bf16.xpose.msra.mxu0 %v1236
        %1267 = vmatpush.bf16.xpose.msra.mxu0 %v1234
        %1268 = vmatpush.bf16.xpose.msra.mxu0 %v1232
        %1269 = vmatpush.bf16.xpose.msra.mxu0 %v1230
        %1270 = vmatmul.bf16.gmra.mxu0 %v1246
        %v1271 = vpop.f32.mrf.mxu0
        %v1272 = vadd.f32 0.0, %v1271
        %v1273 = vpop.f32.mrf.mxu0
        %v1274 = vadd.f32 0.0, %v1273
        %1275 = vmatmul.bf16.gmra.mxu0 %v1248
        %v1276 = vpop.f32.mrf.mxu0
        %v1277 = vadd.f32 0.0, %v1276
        %v1278 = vpop.f32.mrf.mxu0
        %v1279 = vadd.f32 0.0, %v1278
        %1280 = vmatmul.bf16.gmra.mxu0 %v1250
        %v1281 = vpop.f32.mrf.mxu0
        %v1282 = vadd.f32 0.0, %v1281
        %v1283 = vpop.f32.mrf.mxu0
        %v1284 = vadd.f32 0.0, %v1283
        %1285 = vmatmul.bf16.gmra.mxu0 %v1252
        %v1286 = vpop.f32.mrf.mxu0
        %v1287 = vadd.f32 0.0, %v1286
        %v1288 = vpop.f32.mrf.mxu0
        %v1289 = vadd.f32 0.0, %v1288
        %1290 = vmatmul.bf16.gmra.mxu0 %v1254
        %v1291 = vpop.f32.mrf.mxu0
        %v1292 = vadd.f32 0.0, %v1291
        %v1293 = vpop.f32.mrf.mxu0
        %v1294 = vadd.f32 0.0, %v1293
        %1295 = vmatmul.bf16.gmra.mxu0 %v1256
        %v1296 = vpop.f32.mrf.mxu0
        %v1297 = vadd.f32 0.0, %v1296
        %v1298 = vpop.f32.mrf.mxu0
        %v1299 = vadd.f32 0.0, %v1298
        %1300 = vmatmul.bf16.gmra.mxu0 %v1258
        %v1301 = vpop.f32.mrf.mxu0
        %v1302 = vadd.f32 0.0, %v1301
        %v1303 = vpop.f32.mrf.mxu0
        %v1304 = vadd.f32 0.0, %v1303
        %1305 = vmatmul.bf16.gmra.mxu0 %v1260
        %v1306 = vpop.f32.mrf.mxu0
        %v1307 = vadd.f32 0.0, %v1306
        %v1308 = vpop.f32.mrf.mxu0
        %v1309 = vadd.f32 0.0, %v1308
        %1310 = vdwg.mxu0
        %1311 = vmatpush.bf16.xpose.msra.mxu0 %v1245
        %1312 = vmatpush.bf16.xpose.msra.mxu0 %v1243
        %1313 = vmatpush.bf16.xpose.msra.mxu0 %v1241
        %1314 = vmatpush.bf16.xpose.msra.mxu0 %v1239
        %1315 = vmatpush.bf16.xpose.msra.mxu0 %v1237
        %1316 = vmatpush.bf16.xpose.msra.mxu0 %v1235
        %1317 = vmatpush.bf16.xpose.msra.mxu0 %v1233
        %1318 = vmatpush.bf16.xpose.msra.mxu0 %v1231
        %1319 = vmatmul.bf16.gmra.mxu0 %v1247
        %v1320 = vpop.f32.mrf.mxu0
        %v1321 = vadd.f32 %v1272, %v1320
        %v1322 = vpop.f32.mrf.mxu0
        %v1323 = vadd.f32 %v1274, %v1322
        %1324 = vmatmul.bf16.gmra.mxu0 %v1249
        %v1325 = vpop.f32.mrf.mxu0
        %v1326 = vadd.f32 %v1277, %v1325
        %v1327 = vpop.f32.mrf.mxu0
        %v1328 = vadd.f32 %v1279, %v1327
        %1329 = vmatmul.bf16.gmra.mxu0 %v1251
        %v1330 = vpop.f32.mrf.mxu0
        %v1331 = vadd.f32 %v1282, %v1330
        %v1332 = vpop.f32.mrf.mxu0
        %v1333 = vadd.f32 %v1284, %v1332
        %1334 = vmatmul.bf16.gmra.mxu0 %v1253
        %v1335 = vpop.f32.mrf.mxu0
        %v1336 = vadd.f32 %v1287, %v1335
        %v1337 = vpop.f32.mrf.mxu0
        %v1338 = vadd.f32 %v1289, %v1337
        %1339 = vmatmul.bf16.gmra.mxu0 %v1255
        %v1340 = vpop.f32.mrf.mxu0
        %v1341 = vadd.f32 %v1292, %v1340
        %v1342 = vpop.f32.mrf.mxu0
        %v1343 = vadd.f32 %v1294, %v1342
        %1344 = vmatmul.bf16.gmra.mxu0 %v1257
        %v1345 = vpop.f32.mrf.mxu0
        %v1346 = vadd.f32 %v1297, %v1345
        %v1347 = vpop.f32.mrf.mxu0
        %v1348 = vadd.f32 %v1299, %v1347
        %1349 = vmatmul.bf16.gmra.mxu0 %v1259
        %v1350 = vpop.f32.mrf.mxu0
        %v1351 = vadd.f32 %v1302, %v1350
        %v1352 = vpop.f32.mrf.mxu0
        %v1353 = vadd.f32 %v1304, %v1352
        %1354 = vmatmul.bf16.gmra.mxu0 %v1261
        %v1355 = vpop.f32.mrf.mxu0
        %v1356 = vadd.f32 %v1307, %v1355
        %v1357 = vpop.f32.mrf.mxu0
        %v1358 = vadd.f32 %v1309, %v1357
        %1359 = vdwg.mxu0
        %v1360 = vld [vmem:[%s3] sm:$0xff]
        %v1361 = vld [vmem:[%s3 + $0x8] sm:$0xff]
        %v1362 = vld [vmem:[%s3 + $0x10] sm:$0xff]
        %v1363 = vld [vmem:[%s3 + $0x18] sm:$0xff]
        %v1364 = vld [vmem:[%s3 + $0x20] sm:$0xff]
        %v1365 = vld [vmem:[%s3 + $0x28] sm:$0xff]
        %v1366 = vld [vmem:[%s3 + $0x30] sm:$0xff]
        %v1367 = vld [vmem:[%s3 + $0x38] sm:$0xff]
        %v1368 = vld [vmem:[%s3 + $0x40] sm:$0xff]
        %v1369 = vld [vmem:[%s3 + $0x48] sm:$0xff]
        %v1370 = vld [vmem:[%s3 + $0x50] sm:$0xff]
        %v1371 = vld [vmem:[%s3 + $0x58] sm:$0xff]
        %v1372 = vld [vmem:[%s3 + $0x60] sm:$0xff]
        %v1373 = vld [vmem:[%s3 + $0x68] sm:$0xff]
        %v1374 = vld [vmem:[%s3 + $0x70] sm:$0xff]
        %v1375 = vld [vmem:[%s3 + $0x78] sm:$0xff]
        %v1376 = vmul.f32 %v1321, %v1360
        %v1377 = vmul.f32 %v1323, %v1361
        %v1378 = vmul.f32 %v1326, %v1362
        %v1379 = vmul.f32 %v1328, %v1363
        %v1380 = vmul.f32 %v1331, %v1364
        %v1381 = vmul.f32 %v1333, %v1365
        %v1382 = vmul.f32 %v1336, %v1366
        %v1383 = vmul.f32 %v1338, %v1367
        %v1384 = vmul.f32 %v1341, %v1368
        %v1385 = vmul.f32 %v1343, %v1369
        %v1386 = vmul.f32 %v1346, %v1370
        %v1387 = vmul.f32 %v1348, %v1371
        %v1388 = vmul.f32 %v1351, %v1372
        %v1389 = vmul.f32 %v1353, %v1373
        %v1390 = vmul.f32 %v1356, %v1374
        %v1391 = vmul.f32 %v1358, %v1375
        %v1392 = vld [vmem:[%s2] sm:$0xf]
        %1393 = vmatpush.msra.mxu0 %v1391
        %1394 = vmatpush.msra.mxu0 %v1390
        %1395 = vmatpush.msra.mxu0 %v1389
        %1396 = vmatpush.msra.mxu0 %v1388
        %1397 = vmatpush.msra.mxu0 %v1387
        %1398 = vmatpush.msra.mxu0 %v1386
        %1399 = vmatpush.msra.mxu0 %v1385
        %1400 = vmatpush.msra.mxu0 %v1384
        %1401 = vmatpush.msra.mxu0 %v1383
        %1402 = vmatpush.msra.mxu0 %v1382
        %1403 = vmatpush.msra.mxu0 %v1381
        %1404 = vmatpush.msra.mxu0 %v1380
        %1405 = vmatpush.msra.mxu0 %v1379
        %1406 = vmatpush.msra.mxu0 %v1378
        %1407 = vmatpush.msra.mxu0 %v1377
        %1408 = vmatpush.msra.mxu0 %v1376
        %1409 = vmatmul.f32.gmra.mxu0 %v1392
        %v1410 = vpop.f32.mrf.mxu0
        %v1411 = vadd.f32 0.0, %v1410
        %1412 = vdwg.mxu0
        %v1413 = vmax.f32 %v518, %v520
        %v1414 = vmax.f32 %v1413, %v523
        %v1415 = vmax.f32 %v1414, %v525
        %v1416 = vrot.slane %v1415, 4
        %v1417 = vmax.f32 %v1415, %v1416
        %v1418 = vrot.slane %v1417, 2
        %v1419 = vmax.f32 %v1417, %v1418
        %v1420 = vrot.slane %v1419, 1
        %v1421 = vmax.f32 %v1419, %v1420
        %v1422 = vmax.f32 %v647, %v649
        %v1423 = vmax.f32 %v1422, %v652
        %v1424 = vmax.f32 %v1423, %v654
        %v1425 = vrot.slane %v1424, 4
        %v1426 = vmax.f32 %v1424, %v1425
        %v1427 = vrot.slane %v1426, 2
        %v1428 = vmax.f32 %v1426, %v1427
        %v1429 = vrot.slane %v1428, 1
        %v1430 = vmax.f32 %v1428, %v1429
        %v1431 = vmax.f32 %v528, %v530
        %v1432 = vmax.f32 %v1431, %v533
        %v1433 = vmax.f32 %v1432, %v535
        %v1434 = vrot.slane %v1433, 4
        %v1435 = vmax.f32 %v1433, %v1434
        %v1436 = vrot.slane %v1435, 2
        %v1437 = vmax.f32 %v1435, %v1436
        %v1438 = vrot.slane %v1437, 1
        %v1439 = vmax.f32 %v1437, %v1438
        %v1440 = vmax.f32 %v657, %v659
        %v1441 = vmax.f32 %v1440, %v662
        %v1442 = vmax.f32 %v1441, %v664
        %v1443 = vrot.slane %v1442, 4
        %v1444 = vmax.f32 %v1442, %v1443
        %v1445 = vrot.slane %v1444, 2
        %v1446 = vmax.f32 %v1444, %v1445
        %v1447 = vrot.slane %v1446, 1
        %v1448 = vmax.f32 %v1446, %v1447
        %v1449 = vmax.f32 %v538, %v540
        %v1450 = vmax.f32 %v1449, %v543
        %v1451 = vmax.f32 %v1450, %v545
        %v1452 = vrot.slane %v1451, 4
        %v1453 = vmax.f32 %v1451, %v1452
        %v1454 = vrot.slane %v1453, 2
        %v1455 = vmax.f32 %v1453, %v1454
        %v1456 = vrot.slane %v1455, 1
        %v1457 = vmax.f32 %v1455, %v1456
        %v1458 = vmax.f32 %v667, %v669
        %v1459 = vmax.f32 %v1458, %v672
        %v1460 = vmax.f32 %v1459, %v674
        %v1461 = vrot.slane %v1460, 4
        %v1462 = vmax.f32 %v1460, %v1461
        %v1463 = vrot.slane %v1462, 2
        %v1464 = vmax.f32 %v1462, %v1463
        %v1465 = vrot.slane %v1464, 1
        %v1466 = vmax.f32 %v1464, %v1465
        %v1467 = vmax.f32 %v548, %v550
        %v1468 = vmax.f32 %v1467, %v553
        %v1469 = vmax.f32 %v1468, %v555
        %v1470 = vrot.slane %v1469, 4
        %v1471 = vmax.f32 %v1469, %v1470
        %v1472 = vrot.slane %v1471, 2
        %v1473 = vmax.f32 %v1471, %v1472
        %v1474 = vrot.slane %v1473, 1
        %v1475 = vmax.f32 %v1473, %v1474
        %v1476 = vmax.f32 %v677, %v679
        %v1477 = vmax.f32 %v1476, %v682
        %v1478 = vmax.f32 %v1477, %v684
        %v1479 = vrot.slane %v1478, 4
        %v1480 = vmax.f32 %v1478, %v1479
        %v1481 = vrot.slane %v1480, 2
        %v1482 = vmax.f32 %v1480, %v1481
        %v1483 = vrot.slane %v1482, 1
        %v1484 = vmax.f32 %v1482, %v1483
        %v1485 = vsub.f32 %v518, %v1421
        %v1486 = vsub.f32 %v647, %v1430
        %v1487 = vsub.f32 %v520, %v1421
        %v1488 = vsub.f32 %v649, %v1430
        %v1489 = vsub.f32 %v523, %v1421
        %v1490 = vsub.f32 %v652, %v1430
        %v1491 = vsub.f32 %v525, %v1421
        %v1492 = vsub.f32 %v654, %v1430
        %v1493 = vsub.f32 %v528, %v1439
        %v1494 = vsub.f32 %v657, %v1448
        %v1495 = vsub.f32 %v530, %v1439
        %v1496 = vsub.f32 %v659, %v1448
        %v1497 = vsub.f32 %v533, %v1439
        %v1498 = vsub.f32 %v662, %v1448
        %v1499 = vsub.f32 %v535, %v1439
        %v1500 = vsub.f32 %v664, %v1448
        %v1501 = vsub.f32 %v538, %v1457
        %v1502 = vsub.f32 %v667, %v1466
        %v1503 = vsub.f32 %v540, %v1457
        %v1504 = vsub.f32 %v669, %v1466
        %v1505 = vsub.f32 %v543, %v1457
        %v1506 = vsub.f32 %v672, %v1466
        %v1507 = vsub.f32 %v545, %v1457
        %v1508 = vsub.f32 %v674, %v1466
        %v1509 = vsub.f32 %v548, %v1475
        %v1510 = vsub.f32 %v677, %v1484
        %v1511 = vsub.f32 %v550, %v1475
        %v1512 = vsub.f32 %v679, %v1484
        %v1513 = vsub.f32 %v553, %v1475
        %v1514 = vsub.f32 %v682, %v1484
        %v1515 = vsub.f32 %v555, %v1475
        %v1516 = vsub.f32 %v684, %v1484
        %v1517 = vmul.f32 %v1485, 1.442695
        %v1518 = vpow.pop %v1517
        %v1519 = vmul.f32 %v1486, 1.442695
        %v1520 = vpow.pop %v1519
        %v1521 = vmul.f32 %v1487, 1.442695
        %v1522 = vpow.pop %v1521
        %v1523 = vmul.f32 %v1488, 1.442695
        %v1524 = vpow.pop %v1523
        %v1525 = vmul.f32 %v1489, 1.442695
        %v1526 = vpow.pop %v1525
        %v1527 = vmul.f32 %v1490, 1.442695
        %v1528 = vpow.pop %v1527
        %v1529 = vmul.f32 %v1491, 1.442695
        %v1530 = vpow.pop %v1529
        %v1531 = vmul.f32 %v1492, 1.442695
        %v1532 = vpow.pop %v1531
        %v1533 = vmul.f32 %v1493, 1.442695
        %v1534 = vpow.pop %v1533
        %v1535 = vmul.f32 %v1494, 1.442695
        %v1536 = vpow.pop %v1535
        %v1537 = vmul.f32 %v1495, 1.442695
        %v1538 = vpow.pop %v1537
        %v1539 = vmul.f32 %v1496, 1.442695
        %v1540 = vpow.pop %v1539
        %v1541 = vmul.f32 %v1497, 1.442695
        %v1542 = vpow.pop %v1541
        %v1543 = vmul.f32 %v1498, 1.442695
        %v1544 = vpow.pop %v1543
        %v1545 = vmul.f32 %v1499, 1.442695
        %v1546 = vpow.pop %v1545
        %v1547 = vmul.f32 %v1500, 1.442695
        %v1548 = vpow.pop %v1547
        %v1549 = vmul.f32 %v1501, 1.442695
        %v1550 = vpow.pop %v1549
        %v1551 = vmul.f32 %v1502, 1.442695
        %v1552 = vpow.pop %v1551
        %v1553 = vmul.f32 %v1503, 1.442695
        %v1554 = vpow.pop %v1553
        %v1555 = vmul.f32 %v1504, 1.442695
        %v1556 = vpow.pop %v1555
        %v1557 = vmul.f32 %v1505, 1.442695
        %v1558 = vpow.pop %v1557
        %v1559 = vmul.f32 %v1506, 1.442695
        %v1560 = vpow.pop %v1559
        %v1561 = vmul.f32 %v1507, 1.442695
        %v1562 = vpow.pop %v1561
        %v1563 = vmul.f32 %v1508, 1.442695
        %v1564 = vpow.pop %v1563
        %v1565 = vmul.f32 %v1509, 1.442695
        %v1566 = vpow.pop %v1565
        %v1567 = vmul.f32 %v1510, 1.442695
        %v1568 = vpow.pop %v1567
        %v1569 = vmul.f32 %v1511, 1.442695
        %v1570 = vpow.pop %v1569
        %v1571 = vmul.f32 %v1512, 1.442695
        %v1572 = vpow.pop %v1571
        %v1573 = vmul.f32 %v1513, 1.442695
        %v1574 = vpow.pop %v1573
        %v1575 = vmul.f32 %v1514, 1.442695
        %v1576 = vpow.pop %v1575
        %v1577 = vmul.f32 %v1515, 1.442695
        %v1578 = vpow.pop %v1577
        %v1579 = vmul.f32 %v1516, 1.442695
        %v1580 = vpow.pop %v1579
        %v1581 = vadd.f32 %v1518, %v1522
        %v1582 = vadd.f32 %v1581, %v1526
        %v1583 = vadd.f32 %v1582, %v1530
        %v1584 = vrot.slane %v1583, 4
        %v1585 = vadd.f32 %v1583, %v1584
        %v1586 = vrot.slane %v1585, 2
        %v1587 = vadd.f32 %v1585, %v1586
        %v1588 = vrot.slane %v1587, 1
        %v1589 = vadd.f32 %v1587, %v1588
        %v1590 = vadd.f32 %v1520, %v1524
        %v1591 = vadd.f32 %v1590, %v1528
        %v1592 = vadd.f32 %v1591, %v1532
        %v1593 = vrot.slane %v1592, 4
        %v1594 = vadd.f32 %v1592, %v1593
        %v1595 = vrot.slane %v1594, 2
        %v1596 = vadd.f32 %v1594, %v1595
        %v1597 = vrot.slane %v1596, 1
        %v1598 = vadd.f32 %v1596, %v1597
        %v1599 = vadd.f32 %v1534, %v1538
        %v1600 = vadd.f32 %v1599, %v1542
        %v1601 = vadd.f32 %v1600, %v1546
        %v1602 = vrot.slane %v1601, 4
        %v1603 = vadd.f32 %v1601, %v1602
        %v1604 = vrot.slane %v1603, 2
        %v1605 = vadd.f32 %v1603, %v1604
        %v1606 = vrot.slane %v1605, 1
        %v1607 = vadd.f32 %v1605, %v1606
        %v1608 = vadd.f32 %v1536, %v1540
        %v1609 = vadd.f32 %v1608, %v1544
        %v1610 = vadd.f32 %v1609, %v1548
        %v1611 = vrot.slane %v1610, 4
        %v1612 = vadd.f32 %v1610, %v1611
        %v1613 = vrot.slane %v1612, 2
        %v1614 = vadd.f32 %v1612, %v1613
        %v1615 = vrot.slane %v1614, 1
        %v1616 = vadd.f32 %v1614, %v1615
        %v1617 = vadd.f32 %v1550, %v1554
        %v1618 = vadd.f32 %v1617, %v1558
        %v1619 = vadd.f32 %v1618, %v1562
        %v1620 = vrot.slane %v1619, 4
        %v1621 = vadd.f32 %v1619, %v1620
        %v1622 = vrot.slane %v1621, 2
        %v1623 = vadd.f32 %v1621, %v1622
        %v1624 = vrot.slane %v1623, 1
        %v1625 = vadd.f32 %v1623, %v1624
        %v1626 = vadd.f32 %v1552, %v1556
        %v1627 = vadd.f32 %v1626, %v1560
        %v1628 = vadd.f32 %v1627, %v1564
        %v1629 = vrot.slane %v1628, 4
        %v1630 = vadd.f32 %v1628, %v1629
        %v1631 = vrot.slane %v1630, 2
        %v1632 = vadd.f32 %v1630, %v1631
        %v1633 = vrot.slane %v1632, 1
        %v1634 = vadd.f32 %v1632, %v1633
        %v1635 = vadd.f32 %v1566, %v1570
        %v1636 = vadd.f32 %v1635, %v1574
        %v1637 = vadd.f32 %v1636, %v1578
        %v1638 = vrot.slane %v1637, 4
        %v1639 = vadd.f32 %v1637, %v1638
        %v1640 = vrot.slane %v1639, 2
        %v1641 = vadd.f32 %v1639, %v1640
        %v1642 = vrot.slane %v1641, 1
        %v1643 = vadd.f32 %v1641, %v1642
        %v1644 = vadd.f32 %v1568, %v1572
        %v1645 = vadd.f32 %v1644, %v1576
        %v1646 = vadd.f32 %v1645, %v1580
        %v1647 = vrot.slane %v1646, 4
        %v1648 = vadd.f32 %v1646, %v1647
        %v1649 = vrot.slane %v1648, 2
        %v1650 = vadd.f32 %v1648, %v1649
        %v1651 = vrot.slane %v1650, 1
        %v1652 = vadd.f32 %v1650, %v1651
        %v1653 = vrcp.pop %v1589
        %v1654 = vmul.f32 %v1589, %v1653
        %v1655 = vsub.f32 1.0, %v1654
        %v1656 = vmul.f32 %v1653, %v1655
        %v1657 = vadd.f32 %v1653, %v1656
        %vm1658 = vweird.f32 %v1589
        %vm1659 = vweird.f32 %v1653
        %vm1660 = vmor %vm1658, %vm1659
        %v1661 = vsel %vm1660, %v1653, %v1657
        %v1662 = vand.u32 2147483647, %v1589
        %vm1663 = vcmp.eq.f32.partialorder %v1662, 8.507059e+37
        %v1664 = vand.u32 %v1589, 2147483648
        %v1665 = vor.u32 1.1754944e-38, %v1664
        %v1666 = vsel %vm1663, %v1665, %v1661
        %v1667 = vrcp.pop %v1598
        %v1668 = vmul.f32 %v1598, %v1667
        %v1669 = vsub.f32 1.0, %v1668
        %v1670 = vmul.f32 %v1667, %v1669
        %v1671 = vadd.f32 %v1667, %v1670
        %vm1672 = vweird.f32 %v1598
        %vm1673 = vweird.f32 %v1667
        %vm1674 = vmor %vm1672, %vm1673
        %v1675 = vsel %vm1674, %v1667, %v1671
        %v1676 = vand.u32 2147483647, %v1598
        %vm1677 = vcmp.eq.f32.partialorder %v1676, 8.507059e+37
        %v1678 = vand.u32 %v1598, 2147483648
        %v1679 = vor.u32 1.1754944e-38, %v1678
        %v1680 = vsel %vm1677, %v1679, %v1675
        %v1681 = vrcp.pop %v1607
        %v1682 = vmul.f32 %v1607, %v1681
        %v1683 = vsub.f32 1.0, %v1682
        %v1684 = vmul.f32 %v1681, %v1683
        %v1685 = vadd.f32 %v1681, %v1684
        %vm1686 = vweird.f32 %v1607
        %vm1687 = vweird.f32 %v1681
        %vm1688 = vmor %vm1686, %vm1687
        %v1689 = vsel %vm1688, %v1681, %v1685
        %v1690 = vand.u32 2147483647, %v1607
        %vm1691 = vcmp.eq.f32.partialorder %v1690, 8.507059e+37
        %v1692 = vand.u32 %v1607, 2147483648
        %v1693 = vor.u32 1.1754944e-38, %v1692
        %v1694 = vsel %vm1691, %v1693, %v1689
        %v1695 = vrcp.pop %v1616
        %v1696 = vmul.f32 %v1616, %v1695
        %v1697 = vsub.f32 1.0, %v1696
        %v1698 = vmul.f32 %v1695, %v1697
        %v1699 = vadd.f32 %v1695, %v1698
        %vm1700 = vweird.f32 %v1616
        %vm1701 = vweird.f32 %v1695
        %vm1702 = vmor %vm1700, %vm1701
        %v1703 = vsel %vm1702, %v1695, %v1699
        %v1704 = vand.u32 2147483647, %v1616
        %vm1705 = vcmp.eq.f32.partialorder %v1704, 8.507059e+37
        %v1706 = vand.u32 %v1616, 2147483648
        %v1707 = vor.u32 1.1754944e-38, %v1706
        %v1708 = vsel %vm1705, %v1707, %v1703
        %v1709 = vrcp.pop %v1625
        %v1710 = vmul.f32 %v1625, %v1709
        %v1711 = vsub.f32 1.0, %v1710
        %v1712 = vmul.f32 %v1709, %v1711
        %v1713 = vadd.f32 %v1709, %v1712
        %vm1714 = vweird.f32 %v1625
        %vm1715 = vweird.f32 %v1709
        %vm1716 = vmor %vm1714, %vm1715
        %v1717 = vsel %vm1716, %v1709, %v1713
        %v1718 = vand.u32 2147483647, %v1625
        %vm1719 = vcmp.eq.f32.partialorder %v1718, 8.507059e+37
        %v1720 = vand.u32 %v1625, 2147483648
        %v1721 = vor.u32 1.1754944e-38, %v1720
        %v1722 = vsel %vm1719, %v1721, %v1717
        %v1723 = vrcp.pop %v1634
        %v1724 = vmul.f32 %v1634, %v1723
        %v1725 = vsub.f32 1.0, %v1724
        %v1726 = vmul.f32 %v1723, %v1725
        %v1727 = vadd.f32 %v1723, %v1726
        %vm1728 = vweird.f32 %v1634
        %vm1729 = vweird.f32 %v1723
        %vm1730 = vmor %vm1728, %vm1729
        %v1731 = vsel %vm1730, %v1723, %v1727
        %v1732 = vand.u32 2147483647, %v1634
        %vm1733 = vcmp.eq.f32.partialorder %v1732, 8.507059e+37
        %v1734 = vand.u32 %v1634, 2147483648
        %v1735 = vor.u32 1.1754944e-38, %v1734
        %v1736 = vsel %vm1733, %v1735, %v1731
        %v1737 = vrcp.pop %v1643
        %v1738 = vmul.f32 %v1643, %v1737
        %v1739 = vsub.f32 1.0, %v1738
        %v1740 = vmul.f32 %v1737, %v1739
        %v1741 = vadd.f32 %v1737, %v1740
        %vm1742 = vweird.f32 %v1643
        %vm1743 = vweird.f32 %v1737
        %vm1744 = vmor %vm1742, %vm1743
        %v1745 = vsel %vm1744, %v1737, %v1741
        %v1746 = vand.u32 2147483647, %v1643
        %vm1747 = vcmp.eq.f32.partialorder %v1746, 8.507059e+37
        %v1748 = vand.u32 %v1643, 2147483648
        %v1749 = vor.u32 1.1754944e-38, %v1748
        %v1750 = vsel %vm1747, %v1749, %v1745
        %v1751 = vrcp.pop %v1652
        %v1752 = vmul.f32 %v1652, %v1751
        %v1753 = vsub.f32 1.0, %v1752
        %v1754 = vmul.f32 %v1751, %v1753
        %v1755 = vadd.f32 %v1751, %v1754
        %vm1756 = vweird.f32 %v1652
        %vm1757 = vweird.f32 %v1751
        %vm1758 = vmor %vm1756, %vm1757
        %v1759 = vsel %vm1758, %v1751, %v1755
        %v1760 = vand.u32 2147483647, %v1652
        %vm1761 = vcmp.eq.f32.partialorder %v1760, 8.507059e+37
        %v1762 = vand.u32 %v1652, 2147483648
        %v1763 = vor.u32 1.1754944e-38, %v1762
        %v1764 = vsel %vm1761, %v1763, %v1759
        %v1765 = vmul.f32 %v1666, 0.17677669
        %v1766 = vmul.f32 %v1680, 0.17677669
        %v1767 = vmul.f32 %v1694, 0.17677669
        %v1768 = vmul.f32 %v1708, 0.17677669
        %v1769 = vmul.f32 %v1722, 0.17677669
        %v1770 = vmul.f32 %v1736, 0.17677669
        %v1771 = vmul.f32 %v1750, 0.17677669
        %v1772 = vmul.f32 %v1764, 0.17677669
        %v1773 = vmul.f32 %v1518, %v1765
        %v1774 = vmul.f32 %v1520, %v1766
        %v1775 = vmul.f32 %v1522, %v1765
        %v1776 = vmul.f32 %v1524, %v1766
        %v1777 = vmul.f32 %v1526, %v1765
        %v1778 = vmul.f32 %v1528, %v1766
        %v1779 = vmul.f32 %v1530, %v1765
        %v1780 = vmul.f32 %v1532, %v1766
        %v1781 = vmul.f32 %v1534, %v1767
        %v1782 = vmul.f32 %v1536, %v1768
        %v1783 = vmul.f32 %v1538, %v1767
        %v1784 = vmul.f32 %v1540, %v1768
        %v1785 = vmul.f32 %v1542, %v1767
        %v1786 = vmul.f32 %v1544, %v1768
        %v1787 = vmul.f32 %v1546, %v1767
        %v1788 = vmul.f32 %v1548, %v1768
        %v1789 = vmul.f32 %v1550, %v1769
        %v1790 = vmul.f32 %v1552, %v1770
        %v1791 = vmul.f32 %v1554, %v1769
        %v1792 = vmul.f32 %v1556, %v1770
        %v1793 = vmul.f32 %v1558, %v1769
        %v1794 = vmul.f32 %v1560, %v1770
        %v1795 = vmul.f32 %v1562, %v1769
        %v1796 = vmul.f32 %v1564, %v1770
        %v1797 = vmul.f32 %v1566, %v1771
        %v1798 = vmul.f32 %v1568, %v1772
        %v1799 = vmul.f32 %v1570, %v1771
        %v1800 = vmul.f32 %v1572, %v1772
        %v1801 = vmul.f32 %v1574, %v1771
        %v1802 = vmul.f32 %v1576, %v1772
        %v1803 = vmul.f32 %v1578, %v1771
        %v1804 = vmul.f32 %v1580, %v1772
        %v1805 = vld [vmem:[%s4] sm:$0xf]
        %1807 = vset.pattern.permute.xlu0 0
        %1808 = vperm.xlu0 %1807, %v1805
        %v1809 = vpop.permute.xlu0 %1808
        %1811 = vmatpush.msra.mxu0 %v1803
        %1812 = vmatpush.msra.mxu0 %v1801
        %1813 = vmatpush.msra.mxu0 %v1799
        %1814 = vmatpush.msra.mxu0 %v1797
        %1815 = vmatpush.msra.mxu0 %v1795
        %1816 = vmatpush.msra.mxu0 %v1793
        %1817 = vmatpush.msra.mxu0 %v1791
        %1818 = vmatpush.msra.mxu0 %v1789
        %1819 = vmatpush.msra.mxu0 %v1787
        %1820 = vmatpush.msra.mxu0 %v1785
        %1821 = vmatpush.msra.mxu0 %v1783
        %1822 = vmatpush.msra.mxu0 %v1781
        %1823 = vmatpush.msra.mxu0 %v1779
        %1824 = vmatpush.msra.mxu0 %v1777
        %1825 = vmatpush.msra.mxu0 %v1775
        %1826 = vmatpush.msra.mxu0 %v1773
        %1827 = vmatmul.f32.gmra.mxu0 %v1411
        %v1828 = vpop.f32.mrf.mxu0
        %v1829 = vadd.f32 %v1809, %v1828
        %1830 = vdwg.mxu0
        %1831 = vmatpush.msra.mxu0 %v1804
        %1832 = vmatpush.msra.mxu0 %v1802
        %1833 = vmatpush.msra.mxu0 %v1800
        %1834 = vmatpush.msra.mxu0 %v1798
        %1835 = vmatpush.msra.mxu0 %v1796
        %1836 = vmatpush.msra.mxu0 %v1794
        %1837 = vmatpush.msra.mxu0 %v1792
        %1838 = vmatpush.msra.mxu0 %v1790
        %1839 = vmatpush.msra.mxu0 %v1788
        %1840 = vmatpush.msra.mxu0 %v1786
        %1841 = vmatpush.msra.mxu0 %v1784
        %1842 = vmatpush.msra.mxu0 %v1782
        %1843 = vmatpush.msra.mxu0 %v1780
        %1844 = vmatpush.msra.mxu0 %v1778
        %1845 = vmatpush.msra.mxu0 %v1776
        %1846 = vmatpush.msra.mxu0 %v1774
        %1847 = vmatmul.f32.gmra.mxu0 %v1411
        %v1848 = vpop.f32.mrf.mxu0
        %v1849 = vadd.f32 %v1809, %v1848
        %1850 = vdwg.mxu0
        %vm1851 = vcmask 1043456
        %v1852 = vsel %vm1851, %v1829, 0.0
        %v1853 = vrot.slane %v1852, 4
        %v1854 = vadd.f32 %v1852, %v1853
        %v1855 = vrot.slane %v1854, 2
        %v1856 = vadd.f32 %v1854, %v1855
        %v1857 = vrot.slane %v1856, 1
        %v1858 = vadd.f32 %v1856, %v1857
        %v1859 = vsel %vm1851, %v1849, 0.0
        %v1860 = vrot.slane %v1859, 4
        %v1861 = vadd.f32 %v1859, %v1860
        %v1862 = vrot.slane %v1861, 2
        %v1863 = vadd.f32 %v1861, %v1862
        %v1864 = vrot.slane %v1863, 1
        %v1865 = vadd.f32 %v1863, %v1864
        %v1866 = vrcp.pop 4.0
        %v1867 = vmul.f32 4.0, %v1866
        %v1868 = vsub.f32 1.0, %v1867
        %v1869 = vmul.f32 %v1866, %v1868
        %v1870 = vadd.f32 %v1866, %v1869
        %vm1871 = vweird.f32 %v1866
        %v1872 = vsel %vm1871, %v1866, %v1870
        %v1873 = vmul.f32 %v1858, %v1872
        %v1874 = vmul.f32 %v1865, %v1872
        %v1875 = vsub.f32 %v1829, %v1873
        %v1876 = vsub.f32 %v1849, %v1874
        %v1877 = vmul.f32 %v1875, %v1875
        %v1878 = vmul.f32 %v1876, %v1876
        %v1879 = vsel %vm1851, %v1877, 0.0
        %v1880 = vrot.slane %v1879, 4
        %v1881 = vadd.f32 %v1879, %v1880
        %v1882 = vrot.slane %v1881, 2
        %v1883 = vadd.f32 %v1881, %v1882
        %v1884 = vrot.slane %v1883, 1
        %v1885 = vadd.f32 %v1883, %v1884
        %v1886 = vsel %vm1851, %v1878, 0.0
        %v1887 = vrot.slane %v1886, 4
        %v1888 = vadd.f32 %v1886, %v1887
        %v1889 = vrot.slane %v1888, 2
        %v1890 = vadd.f32 %v1888, %v1889
        %v1891 = vrot.slane %v1890, 1
        %v1892 = vadd.f32 %v1890, %v1891
        %v1893 = vmul.f32 %v1885, %v1872
        %v1894 = vmul.f32 %v1892, %v1872
        %v1895 = vadd.f32 %v1893, 1e-05
        %v1896 = vadd.f32 %v1894, 1e-05
        %v1897 = vrsqrt.pop %v1895
        %v1898 = vmul.f32 %v1897, %v1895
        %v1899 = vmul.f32 %v1898, %v1897
        %v1900 = vmul.f32 0.5, %v1899
        %v1901 = vsub.f32 1.5, %v1900
        %v1902 = vmul.f32 %v1897, %v1901
        %vm1903 = vweird.f32 %v1895
        %vm1904 = vweird.f32 %v1897
        %vm1905 = vmor %vm1903, %vm1904
        %v1906 = vsel %vm1905, %v1897, %v1902
        %v1907 = vrsqrt.pop %v1896
        %v1908 = vmul.f32 %v1907, %v1896
        %v1909 = vmul.f32 %v1908, %v1907
        %v1910 = vmul.f32 0.5, %v1909
        %v1911 = vsub.f32 1.5, %v1910
        %v1912 = vmul.f32 %v1907, %v1911
        %vm1913 = vweird.f32 %v1896
        %vm1914 = vweird.f32 %v1907
        %vm1915 = vmor %vm1913, %vm1914
        %v1916 = vsel %vm1915, %v1907, %v1912
        %v1917 = vmul.f32 %v1875, %v1906
        %v1918 = vmul.f32 %v1876, %v1916
        %v1919 = vld [vmem:[%s5] sm:$0xf]
        %1921 = vset.pattern.permute.xlu0 0
        %1922 = vperm.xlu0 %1921, %v1919
        %v1923 = vpop.permute.xlu0 %1922
        %v1925 = vmul.f32 %v1917, %v1923
        %v1926 = vmul.f32 %v1918, %v1923
        %v1929 = vrot.slane %v1926, 4
        %v1930 = vsel %vm1851, %v1925, %v1929
        %1932 = vst [vmem:[%s244] sm:$0xff] %v1930
        %s1933 = sand.u32 %s159, 1
        %s1934 = scalar_lea.sflag [#allocation3], %s1933
        %s1935 = sand.u32 %s159, 1
        %s1936 = smul.addr %s1935, 8
        %s1937 = scalar_lea.vmem [#allocation2], %s1936
        // Predicated region
        $region45: #{tpu_custom_call.1} parent=43 // pred_check
          %p1938 = pneg %p169
        $region46: #{tpu_custom_call.1} parent=43 // pred_check_branch
          %1940 = sbr.rel (%p1938) target = $region48
        $region47: #{tpu_custom_call.1} parent=43 // pred_region
          %1942 = vsyncadd %s1934, 0
          %s1943 = smul.addr %s20, 2
          %s1944 = smul.addr %s1943, 4
          %s1945 = scalar_lea.hbm %s6, %s1944
          %s1947 = sshll.u32 %s1937, 4
          %s1948 = int_to_ptr.vmem [resolvable:$true] %s1947
          %s1949 = sshll.u32 %s1945, 4
          %s1950 = int_to_ptr.hbm [resolvable:$true] %s1949
          %1952 = dma.vmem_to_hbm [thread:$0]  %s1948, 128, %s1950, %s1934
        $region48: #{tpu_custom_call.1} parent=43 // pred_fallthru
          _
      $region44: #{tpu_custom_call.1} parent=5 // pred_fallthru
        _
      %p1953 = scmp.le.s32.totalorder 2, %s15
      // Predicated region
      $region49: #{tpu_custom_call.1} parent=5 // pred_check
        %p1954 = pneg %p1953
      $region50: #{tpu_custom_call.1} parent=5 // pred_check_branch
        %1956 = sbr.rel (%p1954) target = $region52
      $region51: #{tpu_custom_call.1} parent=5 // pred_region
        %s1957 = ssub.s32 %s15, 2
        // Predicated region
        $region53: #{tpu_custom_call.1} parent=51 // pred_check
          %p1958 = pneg %p175
        $region54: #{tpu_custom_call.1} parent=51 // pred_check_branch
          %1960 = sbr.rel (%p1958) target = $region56
        $region55: #{tpu_custom_call.1} parent=51 // pred_region
          %s1961 = sand.u32 %s160, 1
          %s1962 = scalar_lea.sflag [#allocation3], %s1961
          %s1963 = sand.u32 %s160, 1
          %s1964 = smul.addr %s1963, 8
          %s1965 = scalar_lea.vmem [#allocation2], %s1964
          %1967 = dma.done %s1962, 128
        $region56: #{tpu_custom_call.1} parent=51 // pred_fallthru
          _
      $region52: #{tpu_custom_call.1} parent=5 // pred_fallthru
        _
    $region6: #{tpu_custom_call.1} parent=1 // loop_footer
      %s19 = sadd.s32 1, %s15
    $region7: #{tpu_custom_call.1} parent=1 // loop_footer_branch
      %14 = sbr.rel target = $region3
    $region8: #{tpu_custom_call.1} parent=1 // loop_exit
      _
    %1968 = vsyncpa [#allocation3], 1
    %s1969 = scalar_lea.sflag [#allocation3], 1
    %1970 = vsyncpa %s1969, 1

</llo_original>
